<compile_context>
chip_gen: v7x
topology: tpu7x:2x2x1
jax: 0.10.0
libtpu: 0.0.40
codegen_flags: <defaults>
</compile_context>

<pallas_src>
import jax
import jax.numpy as jnp
from jax import lax
from jax.experimental import pallas as pl
from jax.experimental.pallas import tpu as pltpu


# ----------------------------------------------------------------------------
# Fused self-attention kernel (one grid step == Bblk batch elements)
# ----------------------------------------------------------------------------
def _self_attn_kernel(x_ref, w_ref, b_ref, out_ref, attn_ref):
    """x_ref: (Bblk, C, N); w_ref: (Ctot, C); b_ref: (Ctot, 1);
    out_ref: (Bblk, C, N); attn_ref: (Bblk, N, N).  Ctot = C + 2*(C//8)."""
    f32 = jnp.float32
    bf16 = jnp.bfloat16

    bblk, c, n = x_ref.shape
    ctot = w_ref.shape[0]
    c8 = (ctot - c) // 2

    # Hoisted out of the per-batch loop: resident fused weight (cast once) and
    # the bias broadcast (JAX does not CSE broadcast_in_dim inside the loop).
    w = w_ref[...].astype(bf16)                               # (Ctot, C)
    bias = jnp.broadcast_to(b_ref[...], (ctot, n))            # (Ctot, N) f32

    def body(bi, carry):
        x_cn = x_ref[bi].astype(bf16)                         # (C, N)

        # Fused V/Q/K projection: one MXU matmul, f32 accumulation.
        proj = lax.dot_general(w, x_cn, (((1,), (0,)), ((), ())),
                               preferred_element_type=f32) + bias   # (Ctot, N)
        v_t = proj[:c]                                        # (C,  N)
        q_t = proj[c:c + c8]                                  # (C8, N)
        k_t = proj[c + c8:]                                   # (C8, N)

        # energy[i, j] = sum_c q_t[c, i] * k_t[c, j]  (no explicit transpose)
        energy = lax.dot_general(q_t.astype(bf16), k_t.astype(bf16),
                                 (((0,), (0,)), ((), ())),
                                 preferred_element_type=f32)  # (N, N)

        # Row softmax over keys, numerically stabilized, kept in f32.
        m = jnp.max(energy, axis=-1, keepdims=True)
        e = jnp.exp(energy - m)
        inv = pl.reciprocal(jnp.sum(e, axis=-1, keepdims=True), approx=True)
        attn = e * inv                                        # (N, N)

        # out[c, i] = sum_j v_t[c, j] * attn[i, j]  -> directly (C, N) layout,
        # so the wrapper only needs a free reshape back to NCHW.
        out_cn = lax.dot_general(v_t.astype(bf16), attn.astype(bf16),
                                 (((1,), (1,)), ((), ())),
                                 preferred_element_type=f32)  # (C, N)

        attn_ref[bi] = attn.astype(attn_ref.dtype)
        out_ref[bi] = out_cn.astype(out_ref.dtype)
        return carry

    lax.fori_loop(0, bblk, body, 0, unroll=True)


# ----------------------------------------------------------------------------
# Wrapper
# ----------------------------------------------------------------------------
def self_attn_forward(x, params, *, block_b=2):
    """x: (B, C, W, H) -> (out (B, C, W, H), attention (B, N, N))."""
    B, C, W, H = x.shape
    N = W * H
    wq, bq, wk, bk, wv, bv = params       # conv layout: (out_ch, in_ch), (out_ch,)
    C8 = wq.shape[0]
    Ctot = C + 2 * C8

    # Fuse the three 1x1-conv weights ([V | Q | K]; V first so the wide C-row
    # slice starts at sublane 0).  Tiny one-time op on (Ctot, C) weights.
    w_fused = jnp.concatenate([wv, wq, wk], axis=0).astype(jnp.float32)
    b_fused = jnp.concatenate([bv, bq, bk], axis=0).reshape(Ctot, 1).astype(jnp.float32)

    # Largest divisor of B that is <= block_b (keeps the grid exact).
    bb = 1
    for d in range(min(block_b, B), 0, -1):
        if B % d == 0:
            bb = d
            break

    # NCHW -> (B, C, N): FREE reshape, no HBM transpose pass.
    x_cn = x.reshape(B, C, N)

    # Rough per-step VMEM footprint (double-buffered I/O + intermediates);
    # only raise the scoped limit when it approaches v5e's 16 MiB default.
    f32b = 4
    est = (2 * bb * (2 * C * N + N * N)          # x/out/attn blocks, double-buffered
           + Ctot * N + 2 * N * N + C * N        # proj, energy/attn, out tile
           + 2 * Ctot * (C + 1)) * f32b          # resident weights/bias
    vmem_limit = None
    if est > 12 * (1 << 20):
        vmem_limit = min(int(1.5 * est), 48 * (1 << 20))

    out_cn, attn = pl.pallas_call(
        _self_attn_kernel,
        out_shape=(jax.ShapeDtypeStruct((B, C, N), x.dtype),
                   jax.ShapeDtypeStruct((B, N, N), x.dtype)),
        grid=(B // bb,),
        in_specs=[
            pl.BlockSpec((bb, C, N), lambda i: (i, 0, 0)),   # activations
            pl.BlockSpec((Ctot, C), lambda i: (0, 0)),       # fused weight (resident)
            pl.BlockSpec((Ctot, 1), lambda i: (0, 0)),       # fused bias  (resident)
        ],
        out_specs=(
            pl.BlockSpec((bb, C, N), lambda i: (i, 0, 0)),   # out (C, N) layout
            pl.BlockSpec((bb, N, N), lambda i: (i, 0, 0)),   # attention
        ),
        compiler_params=pltpu.CompilerParams(
            dimension_semantics=("parallel",),
            vmem_limit_bytes=vmem_limit),
    )(x_cn, w_fused, b_fused)

    # (B, C, N) -> (B, C, W, H): free reshape (matches PyTorch .view()).
    return out_cn.reshape(B, C, W, H), attn


# ----------------------------------------------------------------------------
# Parameters (PyTorch Conv2d(in, out, kernel_size=1) default uniform init)
# ----------------------------------------------------------------------------
def init_params(key, in_dim):
    c8 = in_dim // 8

    def conv_init(k, cin, cout):
        kw, kb = jax.random.split(k)
        s = 1.0 / float(cin) ** 0.5
        w = jax.random.uniform(kw, (cout, cin), jnp.float32, -s, s)  # weight[:, :, 0, 0]
        b = jax.random.uniform(kb, (cout,), jnp.float32, -s, s)
        return w, b

    kq, kk, kv = jax.random.split(key, 3)
    wq, bq = conv_init(kq, in_dim, c8)
    wk, bk = conv_init(kk, in_dim, c8)
    wv, bv = conv_init(kv, in_dim, in_dim)
    return (wq, bq, wk, bk, wv, bv)


# ----------------------------------------------------------------------------
# Pure-JAX reference (mirrors the PyTorch forward exactly, f32 math)
# ----------------------------------------------------------------------------
def self_attn_reference(x, params):
    B, C, W, H = x.shape
    N = W * H
    wq, bq, wk, bk, wv, bv = params
    x_cn = x.reshape(B, C, N)
    q = jnp.einsum("oc,bcn->bon", wq, x_cn) + bq[None, :, None]   # (B, C8, N)
    k = jnp.einsum("oc,bcn->bon", wk, x_cn) + bk[None, :, None]   # (B, C8, N)
    v = jnp.einsum("oc,bcn->bon", wv, x_cn) + bv[None, :, None]   # (B, C,  N)
    energy = jnp.einsum("bci,bcj->bij", q, k)                     # (B, N, N)
    attn = jax.nn.softmax(energy, axis=-1)
    out_cn = jnp.einsum("bcj,bij->bci", v, attn)                  # (B, C, N)
    return out_cn.reshape(B, C, W, H), attn


# ----------------------------------------------------------------------------
if __name__ == "__main__":
    key = jax.random.PRNGKey(0)
    B, C, W, H = 4, 64, 16, 16        # in_dim=64 -> q/k channels = 8; N = 256
    kx, kp = jax.random.split(key)
    x = jax.random.normal(kx, (B, C, W, H), dtype=jnp.float32)
    params = init_params(kp, C)

    out, attn = jax.jit(self_attn_forward)(x, params)
    jax.block_until_ready((out, attn))

    ref_out, ref_attn = self_attn_reference(x, params)

    assert out.shape == (B, C, W, H), out.shape
    assert attn.shape == (B, W * H, W * H), attn.shape
    assert out.dtype == jnp.float32 and attn.dtype == jnp.float32

    # Softmax rows sum to ~1 (approx reciprocal introduces ~1e-4 level error).
    assert jnp.allclose(jnp.sum(attn, axis=-1), 1.0, atol=5e-3)
    # Tolerances account for the bf16 MXU operands (f32 accumulation keeps the
    # error well inside these bounds at the test scale).
    assert jnp.allclose(attn, ref_attn, atol=1e-2, rtol=1e-2)
    assert jnp.allclose(out, ref_out, atol=2e-2, rtol=2e-2)

    print("KERNEL_OK")
</pallas_src>

<mosaic_0001>
module attributes {stable_mosaic.version = 11 : i64} {
  func.func @_self_attn_kernel(%arg0: i32, %arg1: memref<2x64x256xf32, #tpu.memory_space<vmem>>, %arg2: memref<80x64xf32, #tpu.memory_space<vmem>>, %arg3: memref<80x1xf32, #tpu.memory_space<vmem>>, %arg4: memref<2x64x256xf32, #tpu.memory_space<vmem>>, %arg5: memref<2x256x256xf32, #tpu.memory_space<vmem>>) attributes {dimension_semantics = [#tpu.dimension_semantics<parallel>], iteration_bounds = array<i64: 2>, scalar_prefetch = 0 : i64, scratch_operands = 0 : i64, tpu.core_type = #tpu.core_type<tc>, window_params = [{transform_indices = @transform_0, window_bounds = array<i64: 2, 64, 256>}, {pipeline_mode = #tpu.pipeline_mode<synchronous>, transform_indices = @transform_1, window_bounds = array<i64: 80, 64>}, {pipeline_mode = #tpu.pipeline_mode<synchronous>, transform_indices = @transform_2, window_bounds = array<i64: 80, 1>}, {transform_indices = @transform_3, window_bounds = array<i64: 2, 64, 256>}, {transform_indices = @transform_4, window_bounds = array<i64: 2, 256, 256>}]} {
    %c0 = arith.constant 0 : index
    %c0_0 = arith.constant 0 : index
    %0 = vector.load %arg2[%c0, %c0_0] : memref<80x64xf32, #tpu.memory_space<vmem>>, vector<80x64xf32>
    %1 = arith.truncf %0 : vector<80x64xf32> to vector<80x64xbf16>
    %c0_1 = arith.constant 0 : index
    %c0_2 = arith.constant 0 : index
    %2 = vector.load %arg3[%c0_1, %c0_2] : memref<80x1xf32, #tpu.memory_space<vmem>>, vector<80x1xf32>
    %3 = vector.shape_cast %2 : vector<80x1xf32> to vector<80x1xf32>
    %4 = vector.broadcast %3 : vector<80x1xf32> to vector<80x256xf32>
    %c0_i32 = arith.constant 0 : i32
    %5 = arith.index_cast %c0_i32 : i32 to index
    %c0_3 = arith.constant 0 : index
    %c0_4 = arith.constant 0 : index
    %6 = vector.load %arg1[%5, %c0_3, %c0_4] : memref<2x64x256xf32, #tpu.memory_space<vmem>>, vector<1x64x256xf32>
    %7 = vector.shape_cast %6 : vector<1x64x256xf32> to vector<64x256xf32>
    %8 = arith.truncf %7 : vector<64x256xf32> to vector<64x256xbf16>
    %cst = arith.constant dense<0.000000e+00> : vector<80x256xf32>
    %9 = tpu.matmul %1, %8, %cst {dimension_numbers = #tpu.dot_dimension_numbers<[1], [0], [0], [1], [0, 0, 1, 1], [], []>} : vector<80x64xbf16>, vector<64x256xbf16>, vector<80x256xf32> -> vector<80x256xf32>
    %10 = arith.addf %9, %4 : vector<80x256xf32>
    %11 = vector.extract_strided_slice %10 {offsets = [0, 0], sizes = [64, 256], strides = [1, 1]} : vector<80x256xf32> to vector<64x256xf32>
    %12 = vector.extract_strided_slice %10 {offsets = [64, 0], sizes = [8, 256], strides = [1, 1]} : vector<80x256xf32> to vector<8x256xf32>
    %13 = vector.extract_strided_slice %10 {offsets = [72, 0], sizes = [8, 256], strides = [1, 1]} : vector<80x256xf32> to vector<8x256xf32>
    %14 = arith.truncf %12 : vector<8x256xf32> to vector<8x256xbf16>
    %15 = arith.truncf %13 : vector<8x256xf32> to vector<8x256xbf16>
    %cst_5 = arith.constant dense<0.000000e+00> : vector<256x256xf32>
    %16 = tpu.matmul %14, %15, %cst_5 {dimension_numbers = #tpu.dot_dimension_numbers<[0], [0], [1], [1], [0, 1, 1, 1], [], []>} : vector<8x256xbf16>, vector<8x256xbf16>, vector<256x256xf32> -> vector<256x256xf32>
    %cst_6 = arith.constant dense<0xFF800000> : vector<256xf32>
    %17 = vector.multi_reduction <maximumf>, %16, %cst_6 [1] : vector<256x256xf32> to vector<256xf32>
    %18 = vector.shape_cast %17 : vector<256xf32> to vector<256x1xf32>
    %19 = vector.broadcast %18 : vector<256x1xf32> to vector<256x256xf32>
    %20 = arith.subf %16, %19 : vector<256x256xf32>
    %21 = math.exp %20 : vector<256x256xf32>
    %cst_7 = arith.constant dense<0.000000e+00> : vector<256xf32>
    %22 = vector.multi_reduction <add>, %21, %cst_7 [1] : vector<256x256xf32> to vector<256xf32>
    %23 = vector.shape_cast %22 : vector<256xf32> to vector<256x1xf32>
    %24 = tpu.reciprocal %23 {approx = true} : vector<256x1xf32> -> vector<256x1xf32>
    %25 = vector.broadcast %24 : vector<256x1xf32> to vector<256x256xf32>
    %26 = arith.mulf %21, %25 : vector<256x256xf32>
    %27 = arith.truncf %11 : vector<64x256xf32> to vector<64x256xbf16>
    %28 = arith.truncf %26 : vector<256x256xf32> to vector<256x256xbf16>
    %cst_8 = arith.constant dense<0.000000e+00> : vector<64x256xf32>
    %29 = tpu.matmul %27, %28, %cst_8 {dimension_numbers = #tpu.dot_dimension_numbers<[1], [1], [0], [0], [0, 0, 1, 0], [], []>} : vector<64x256xbf16>, vector<256x256xbf16>, vector<64x256xf32> -> vector<64x256xf32>
    %30 = arith.index_cast %c0_i32 : i32 to index
    %c0_9 = arith.constant 0 : index
    %c0_10 = arith.constant 0 : index
    %31 = vector.load %arg5[%30, %c0_9, %c0_10] : memref<2x256x256xf32, #tpu.memory_space<vmem>>, vector<1x256x256xf32>
    %32 = vector.shape_cast %31 : vector<1x256x256xf32> to vector<256x256xf32>
    %33 = vector.shape_cast %26 : vector<256x256xf32> to vector<1x256x256xf32>
    tpu.vector_store %arg5[%30, %c0_9, %c0_10], %33 {strides = array<i32>} : memref<2x256x256xf32, #tpu.memory_space<vmem>>, vector<1x256x256xf32>,
    %34 = arith.index_cast %c0_i32 : i32 to index
    %c0_11 = arith.constant 0 : index
    %c0_12 = arith.constant 0 : index
    %35 = vector.load %arg4[%34, %c0_11, %c0_12] : memref<2x64x256xf32, #tpu.memory_space<vmem>>, vector<1x64x256xf32>
    %36 = vector.shape_cast %35 : vector<1x64x256xf32> to vector<64x256xf32>
    %37 = vector.shape_cast %29 : vector<64x256xf32> to vector<1x64x256xf32>
    tpu.vector_store %arg4[%34, %c0_11, %c0_12], %37 {strides = array<i32>} : memref<2x64x256xf32, #tpu.memory_space<vmem>>, vector<1x64x256xf32>,
    %c1_i32 = arith.constant 1 : i32
    %38 = arith.index_cast %c1_i32 : i32 to index
    %c0_13 = arith.constant 0 : index
    %c0_14 = arith.constant 0 : index
    %39 = vector.load %arg1[%38, %c0_13, %c0_14] : memref<2x64x256xf32, #tpu.memory_space<vmem>>, vector<1x64x256xf32>
    %40 = vector.shape_cast %39 : vector<1x64x256xf32> to vector<64x256xf32>
    %41 = arith.truncf %40 : vector<64x256xf32> to vector<64x256xbf16>
    %cst_15 = arith.constant dense<0.000000e+00> : vector<80x256xf32>
    %42 = tpu.matmul %1, %41, %cst_15 {dimension_numbers = #tpu.dot_dimension_numbers<[1], [0], [0], [1], [0, 0, 1, 1], [], []>} : vector<80x64xbf16>, vector<64x256xbf16>, vector<80x256xf32> -> vector<80x256xf32>
    %43 = arith.addf %42, %4 : vector<80x256xf32>
    %44 = vector.extract_strided_slice %43 {offsets = [0, 0], sizes = [64, 256], strides = [1, 1]} : vector<80x256xf32> to vector<64x256xf32>
    %45 = vector.extract_strided_slice %43 {offsets = [64, 0], sizes = [8, 256], strides = [1, 1]} : vector<80x256xf32> to vector<8x256xf32>
    %46 = vector.extract_strided_slice %43 {offsets = [72, 0], sizes = [8, 256], strides = [1, 1]} : vector<80x256xf32> to vector<8x256xf32>
    %47 = arith.truncf %45 : vector<8x256xf32> to vector<8x256xbf16>
    %48 = arith.truncf %46 : vector<8x256xf32> to vector<8x256xbf16>
    %cst_16 = arith.constant dense<0.000000e+00> : vector<256x256xf32>
    %49 = tpu.matmul %47, %48, %cst_16 {dimension_numbers = #tpu.dot_dimension_numbers<[0], [0], [1], [1], [0, 1, 1, 1], [], []>} : vector<8x256xbf16>, vector<8x256xbf16>, vector<256x256xf32> -> vector<256x256xf32>
    %cst_17 = arith.constant dense<0xFF800000> : vector<256xf32>
    %50 = vector.multi_reduction <maximumf>, %49, %cst_17 [1] : vector<256x256xf32> to vector<256xf32>
    %51 = vector.shape_cast %50 : vector<256xf32> to vector<256x1xf32>
    %52 = vector.broadcast %51 : vector<256x1xf32> to vector<256x256xf32>
    %53 = arith.subf %49, %52 : vector<256x256xf32>
    %54 = math.exp %53 : vector<256x256xf32>
    %cst_18 = arith.constant dense<0.000000e+00> : vector<256xf32>
    %55 = vector.multi_reduction <add>, %54, %cst_18 [1] : vector<256x256xf32> to vector<256xf32>
    %56 = vector.shape_cast %55 : vector<256xf32> to vector<256x1xf32>
    %57 = tpu.reciprocal %56 {approx = true} : vector<256x1xf32> -> vector<256x1xf32>
    %58 = vector.broadcast %57 : vector<256x1xf32> to vector<256x256xf32>
    %59 = arith.mulf %54, %58 : vector<256x256xf32>
    %60 = arith.truncf %44 : vector<64x256xf32> to vector<64x256xbf16>
    %61 = arith.truncf %59 : vector<256x256xf32> to vector<256x256xbf16>
    %cst_19 = arith.constant dense<0.000000e+00> : vector<64x256xf32>
    %62 = tpu.matmul %60, %61, %cst_19 {dimension_numbers = #tpu.dot_dimension_numbers<[1], [1], [0], [0], [0, 0, 1, 0], [], []>} : vector<64x256xbf16>, vector<256x256xbf16>, vector<64x256xf32> -> vector<64x256xf32>
    %63 = arith.index_cast %c1_i32 : i32 to index
    %c0_20 = arith.constant 0 : index
    %c0_21 = arith.constant 0 : index
    %64 = vector.load %arg5[%63, %c0_20, %c0_21] : memref<2x256x256xf32, #tpu.memory_space<vmem>>, vector<1x256x256xf32>
    %65 = vector.shape_cast %64 : vector<1x256x256xf32> to vector<256x256xf32>
    %66 = vector.shape_cast %59 : vector<256x256xf32> to vector<1x256x256xf32>
    tpu.vector_store %arg5[%63, %c0_20, %c0_21], %66 {strides = array<i32>} : memref<2x256x256xf32, #tpu.memory_space<vmem>>, vector<1x256x256xf32>,
    %67 = arith.index_cast %c1_i32 : i32 to index
    %c0_22 = arith.constant 0 : index
    %c0_23 = arith.constant 0 : index
    %68 = vector.load %arg4[%67, %c0_22, %c0_23] : memref<2x64x256xf32, #tpu.memory_space<vmem>>, vector<1x64x256xf32>
    %69 = vector.shape_cast %68 : vector<1x64x256xf32> to vector<64x256xf32>
    %70 = vector.shape_cast %62 : vector<64x256xf32> to vector<1x64x256xf32>
    tpu.vector_store %arg4[%67, %c0_22, %c0_23], %70 {strides = array<i32>} : memref<2x64x256xf32, #tpu.memory_space<vmem>>, vector<1x64x256xf32>,
    %c2_i32 = arith.constant 2 : i32
    return
  }
  func.func @transform_0(%arg0: i32) -> (i32, i32, i32) {
    %c0_i32 = arith.constant 0 : i32
    %c0_i32_0 = arith.constant 0 : i32
    %c0_i32_1 = arith.constant 0 : i32
    return %arg0, %c0_i32, %c0_i32_0 : i32, i32, i32
  }
  func.func @transform_1(%arg0: i32) -> (i32, i32) {
    %c0_i32 = arith.constant 0 : i32
    %c0_i32_0 = arith.constant 0 : i32
    %c0_i32_1 = arith.constant 0 : i32
    return %c0_i32, %c0_i32_0 : i32, i32
  }
  func.func @transform_2(%arg0: i32) -> (i32, i32) {
    %c0_i32 = arith.constant 0 : i32
    %c0_i32_0 = arith.constant 0 : i32
    %c0_i32_1 = arith.constant 0 : i32
    return %c0_i32, %c0_i32_0 : i32, i32
  }
  func.func @transform_3(%arg0: i32) -> (i32, i32, i32) {
    %c0_i32 = arith.constant 0 : i32
    %c0_i32_0 = arith.constant 0 : i32
    %c0_i32_1 = arith.constant 0 : i32
    return %arg0, %c0_i32, %c0_i32_0 : i32, i32, i32
  }
  func.func @transform_4(%arg0: i32) -> (i32, i32, i32) {
    %c0_i32 = arith.constant 0 : i32
    %c0_i32_0 = arith.constant 0 : i32
    %c0_i32_1 = arith.constant 0 : i32
    return %arg0, %c0_i32, %c0_i32_0 : i32, i32, i32
  }
}

</mosaic_0001>

<llo_original>
// kernel: self_attn_forward.1
$region0: #{self_attn_forward.1}
  #allocation0 [shape = 'u32[]', space=smem, size = 0x4, offset = 0x4, fixed_abs, tag = 'smem constant byte address 0x4 - core index']
  #allocation1 [shape = 'u32[144,128]{1,0:T(1,128)}', space=vmem, size = 0x12000, scoped, tag = 'internal scratch']
  %s0 = inlined_call_operand.vmem [shape: f32[4,64,256], index: 0, kind: input, shape index: {}]
  %s1 = inlined_call_operand.vmem [shape: f32[80,64], index: 1, kind: input, shape index: {}]
  %s2 = inlined_call_operand.vmem [shape: f32[80,1], index: 2, kind: input, shape index: {}]
  %s3 = inlined_call_operand.vmem [shape: f32[4,64,256], index: 3, kind: output, shape index: {0}]
  %s4 = inlined_call_operand.hbm [shape: f32[4,256,256], index: 4, kind: output, shape index: {1}]
  %5 = xla_tuple %s3, %s4
  %s6 = sld [smem:[#allocation0]]
  $region53: #{self_attn_forward.1} parent=0
    _
  %s8 = ssub.s32 1, %s6
  %s9 = scalar_select 0, %s8, %s6
  $region1: #{self_attn_forward.1} parent=0
    #allocation2 [shape = 'u8[1048576]{0}', space=vmem, size = 0x100000, scoped, tag = 'output window, operand 1']
    #allocation3 [shape = 's32[2]{0}', space=sflag, size = 0x8, scoped, tag = 'scoped memory for self_attn_forward.1']
    %10 = vsyncpa [#allocation3], 0
    %s11 = scalar_lea.sflag [#allocation3], 1
    %12 = vsyncpa %s11, 0
    loop: start=0, step=1, limit=4
    $region2: #{self_attn_forward.1} parent=1 // loop_pre_header
      _
    $region3: #{self_attn_forward.1} parent=1 // loop_header
      %s14 = sphi 0, %s18
      %p15 = scmp.ge.s32.totalorder %s14, 4
      %s24 = sphi 0, %s26
      %s27 = sphi 0, %s24
      %s28 = sphi 0, %s27
      %s44 = sphi 0, %s28
      %s48 = sphi 0, %s48
      %s50 = sphi 0, %s48
      %s51 = sphi 0, %s50
      %s65 = sphi 0, %s51
      %s69 = sphi 0, %s69
      %s71 = sphi 0, %s69
      %s72 = sphi 0, %s71
      %s86 = sphi 0, %s72
      %s92 = sphi 0, %s94
      %s95 = sphi 0, %s92
      %s96 = sphi 0, %s95
      %s112 = sphi 0, %s96
      %s118 = sphi 0, %s120
      %s121 = sphi 0, %s118
      %s122 = sphi 0, %s121
      %s138 = sphi 0, %s122
    $region4: #{self_attn_forward.1} parent=1 // loop_header_branch
      %17 = sbr.rel (%p15) target = $region8
    $region5: #{self_attn_forward.1} parent=1 // loop_body
      %s19 = ssub.s32 %s14, 1
      %s20 = ssub.s32 %s14, 2
      %s21 = sadd.s32 %s14, 1
      %s22 = ssub.s32 %s14, %s21
      %p23 = scmp.eq.s32.totalorder %s22, 0
      %s25 = sadd.s32 %s24, 1
      %s26 = scalar_select %p23, %s24, %s25
      %p29 = pneg %p23
      %p30 = scmp.eq.s32.totalorder %s14, 1
      %p31 = por %p29, %p30
      %p32 = scmp.ne.s32.totalorder %s24, %s27
      %p33 = scmp.eq.s32.totalorder %s14, 0
      %p34 = por %p32, %p33
      %p35 = scmp.ne.s32.totalorder %s24, %s27
      %p36 = scmp.eq.s32.totalorder %s19, 1
      %p37 = por %p35, %p36
      %p38 = scmp.ne.s32.totalorder %s27, %s28
      %p39 = scmp.eq.s32.totalorder %s19, 0
      %p40 = por %p38, %p39
      %p41 = scmp.ne.s32.totalorder %s27, %s28
      %p42 = scmp.eq.s32.totalorder %s20, 1
      %p43 = por %p41, %p42
      %p45 = scmp.ne.s32.totalorder %s28, %s44
      %p46 = scmp.eq.s32.totalorder %s20, 0
      %p47 = por %p45, %p46
      %s49 = sadd.s32 %s48, 1
      %p52 = scmp.eq.s32.totalorder %s14, 1
      %p53 = scmp.ne.s32.totalorder %s48, %s50
      %p54 = scmp.eq.s32.totalorder %s14, 0
      %p55 = por %p53, %p54
      %p56 = scmp.ne.s32.totalorder %s48, %s50
      %p57 = scmp.eq.s32.totalorder %s19, 1
      %p58 = por %p56, %p57
      %p59 = scmp.ne.s32.totalorder %s50, %s51
      %p60 = scmp.eq.s32.totalorder %s19, 0
      %p61 = por %p59, %p60
      %p62 = scmp.ne.s32.totalorder %s50, %s51
      %p63 = scmp.eq.s32.totalorder %s20, 1
      %p64 = por %p62, %p63
      %p66 = scmp.ne.s32.totalorder %s51, %s65
      %p67 = scmp.eq.s32.totalorder %s20, 0
      %p68 = por %p66, %p67
      %s70 = sadd.s32 %s69, 1
      %p73 = scmp.eq.s32.totalorder %s14, 1
      %p74 = scmp.ne.s32.totalorder %s69, %s71
      %p75 = scmp.eq.s32.totalorder %s14, 0
      %p76 = por %p74, %p75
      %p77 = scmp.ne.s32.totalorder %s69, %s71
      %p78 = scmp.eq.s32.totalorder %s19, 1
      %p79 = por %p77, %p78
      %p80 = scmp.ne.s32.totalorder %s71, %s72
      %p81 = scmp.eq.s32.totalorder %s19, 0
      %p82 = por %p80, %p81
      %p83 = scmp.ne.s32.totalorder %s71, %s72
      %p84 = scmp.eq.s32.totalorder %s20, 1
      %p85 = por %p83, %p84
      %p87 = scmp.ne.s32.totalorder %s72, %s86
      %p88 = scmp.eq.s32.totalorder %s20, 0
      %p89 = por %p87, %p88
      %s90 = ssub.s32 %s14, %s21
      %p91 = scmp.eq.s32.totalorder %s90, 0
      %s93 = sadd.s32 %s92, 1
      %s94 = scalar_select %p91, %s92, %s93
      %p97 = pneg %p91
      %p98 = scmp.eq.s32.totalorder %s14, 1
      %p99 = por %p97, %p98
      %p100 = scmp.ne.s32.totalorder %s92, %s95
      %p101 = scmp.eq.s32.totalorder %s14, 0
      %p102 = por %p100, %p101
      %p103 = scmp.ne.s32.totalorder %s92, %s95
      %p104 = scmp.eq.s32.totalorder %s19, 1
      %p105 = por %p103, %p104
      %p106 = scmp.ne.s32.totalorder %s95, %s96
      %p107 = scmp.eq.s32.totalorder %s19, 0
      %p108 = por %p106, %p107
      %p109 = scmp.ne.s32.totalorder %s95, %s96
      %p110 = scmp.eq.s32.totalorder %s20, 1
      %p111 = por %p109, %p110
      %p113 = scmp.ne.s32.totalorder %s96, %s112
      %p114 = scmp.eq.s32.totalorder %s20, 0
      %p115 = por %p113, %p114
      %s116 = ssub.s32 %s14, %s21
      %p117 = scmp.eq.s32.totalorder %s116, 0
      %s119 = sadd.s32 %s118, 1
      %s120 = scalar_select %p117, %s118, %s119
      %p123 = pneg %p117
      %p124 = scmp.eq.s32.totalorder %s14, 1
      %p125 = por %p123, %p124
      %p126 = scmp.ne.s32.totalorder %s118, %s121
      %p127 = scmp.eq.s32.totalorder %s14, 0
      %p128 = por %p126, %p127
      %p129 = scmp.ne.s32.totalorder %s118, %s121
      %p130 = scmp.eq.s32.totalorder %s19, 1
      %p131 = por %p129, %p130
      %p132 = scmp.ne.s32.totalorder %s121, %s122
      %p133 = scmp.eq.s32.totalorder %s19, 0
      %p134 = por %p132, %p133
      %p135 = scmp.ne.s32.totalorder %s121, %s122
      %p136 = scmp.eq.s32.totalorder %s20, 1
      %p137 = por %p135, %p136
      %p139 = scmp.ne.s32.totalorder %s122, %s138
      %p140 = scmp.eq.s32.totalorder %s20, 0
      %p141 = por %p139, %p140
      %p142 = scmp.le.s32.totalorder 1, %s14
      %p143 = scmp.lt.s32.totalorder %s14, 3
      %p144 = pnand %p142, %p143
      %p145 = pneg %p144
      // Predicated region
      $region9: #{self_attn_forward.1} parent=5 // pred_check
        _
      $region10: #{self_attn_forward.1} parent=5 // pred_check_branch
        %147 = sbr.rel (%p144) target = $region12
      $region11: #{self_attn_forward.1} parent=5 // pred_region
        %s148 = ssub.s32 %s14, 1
        // Predicated region
        $region13: #{self_attn_forward.1} parent=11 // pred_check
          %p149 = pneg %p61
        $region14: #{self_attn_forward.1} parent=11 // pred_check_branch
          %151 = sbr.rel (%p149) target = $region16
        $region15: #{self_attn_forward.1} parent=11 // pred_region
          _
        $region16: #{self_attn_forward.1} parent=11 // pred_fallthru
          _
        // Predicated region
        $region17: #{self_attn_forward.1} parent=11 // pred_check
          %p152 = pneg %p82
        $region18: #{self_attn_forward.1} parent=11 // pred_check_branch
          %154 = sbr.rel (%p152) target = $region20
        $region19: #{self_attn_forward.1} parent=11 // pred_region
          _
        $region20: #{self_attn_forward.1} parent=11 // pred_fallthru
          _
      $region12: #{self_attn_forward.1} parent=5 // pred_fallthru
        _
      %p155 = scmp.lt.s32.totalorder %s14, 2
      // Predicated region
      $region21: #{self_attn_forward.1} parent=5 // pred_check
        %p156 = pneg %p155
      $region22: #{self_attn_forward.1} parent=5 // pred_check_branch
        %158 = sbr.rel (%p156) target = $region24
      $region23: #{self_attn_forward.1} parent=5 // pred_region
        // Predicated region
        $region25: #{self_attn_forward.1} parent=23 // pred_check
          %p159 = pneg %p34
        $region26: #{self_attn_forward.1} parent=23 // pred_check_branch
          %161 = sbr.rel (%p159) target = $region28
        $region27: #{self_attn_forward.1} parent=23 // pred_region
          %s162 = smul.u32 2, %s14
          %p163 = scmp.lt.s32.totalorder %s162, 3
          %s164 = scalar_select %p163, %s162, 3
          %s165 = smul.addr %s164, 16
          %s166 = smul.addr %s165, 8
          %s167 = scalar_lea.vmem %s0, %s166
          %s168 = smul.u32 2, %s14
        $region28: #{self_attn_forward.1} parent=23 // pred_fallthru
          _
      $region24: #{self_attn_forward.1} parent=5 // pred_fallthru
        _
      %p169 = scmp.le.s32.totalorder 1, %s14
      %p170 = scmp.lt.s32.totalorder %s14, 3
      %p171 = pnand %p169, %p170
      %p172 = pneg %p171
      // Predicated region
      $region29: #{self_attn_forward.1} parent=5 // pred_check
        _
      $region30: #{self_attn_forward.1} parent=5 // pred_check_branch
        %174 = sbr.rel (%p171) target = $region32
      $region31: #{self_attn_forward.1} parent=5 // pred_region
        %s175 = ssub.s32 %s14, 1
        %s176 = smul.u32 2, %s19
        %p177 = scmp.lt.s32.totalorder %s176, 3
        %s178 = scalar_select %p177, %s176, 3
        %s179 = smul.addr %s178, 16
        %s180 = smul.addr %s179, 8
        %s181 = scalar_lea.vmem %s0, %s180
        %p182 = pneg %p40
        %p183 = pneg %p37
        %p184 = pneg %p61
        %p185 = pneg %p58
        %p186 = pneg %p82
        %p187 = pneg %p79
        %p188 = pneg %p108
        %p189 = pneg %p105
        %s190 = smul.u32 2, %s19
        %p191 = scmp.lt.s32.totalorder %s190, 3
        %s192 = scalar_select %p191, %s190, 3
        %s193 = smul.addr %s192, 16
        %s194 = smul.addr %s193, 8
        %s195 = scalar_lea.vmem %s3, %s194
        %p196 = pneg %p134
        %p197 = pneg %p131
        %s198 = sand.u32 %s121, 1
        %s199 = scalar_lea.sflag [#allocation3], %s198
        %s200 = sand.u32 %s121, 1
        %s201 = smul.addr %s200, 1024
        %s202 = scalar_lea.vmem [#allocation2], %s201
        %s203 = smul.u32 2, %s19
        %p204 = scmp.lt.s32.totalorder %s203, 3
        %s205 = scalar_select %p204, %s203, 3
        %s206 = smul.addr %s205, 16
        %s207 = smul.addr %s206, 8
        %s208 = scalar_lea.vmem %s0, %s207
        %s209 = smul.u32 2, %s19
        %s210 = smul.u32 2, %s19
        %p211 = scmp.lt.s32.totalorder %s210, 3
        %s212 = scalar_select %p211, %s210, 3
        %s213 = smul.addr %s212, 16
        %s214 = smul.addr %s213, 8
        %s215 = scalar_lea.vmem %s3, %s214
        %s216 = smul.u32 2, %s19
        %s217 = smul.u32 2, %s19
        %v219 = vld [vmem:[%s1] sm:$0xff]
        %v220 = vld [vmem:[%s1 + $0x8] sm:$0xff]
        %v221 = vld [vmem:[%s1 + $0x10] sm:$0xff]
        %v222 = vld [vmem:[%s1 + $0x18] sm:$0xff]
        %v223 = vld [vmem:[%s1 + $0x20] sm:$0xff]
        %v224 = vld [vmem:[%s1 + $0x28] sm:$0xff]
        %v225 = vld [vmem:[%s1 + $0x30] sm:$0xff]
        %v226 = vld [vmem:[%s1 + $0x38] sm:$0xff]
        %v227 = vld [vmem:[%s1 + $0x40] sm:$0xff]
        %v228 = vld [vmem:[%s1 + $0x48] sm:$0xff]
        %v229 = vpack.c.bf16 %v220, %v219
        %v230 = vpack.c.bf16 %v222, %v221
        %v231 = vpack.c.bf16 %v224, %v223
        %v232 = vpack.c.bf16 %v226, %v225
        %v233 = vpack.c.bf16 %v228, %v227
        %v234 = vld [vmem:[%s2] sm:$0xff]
        %v235 = vld [vmem:[%s2 + $0x8] sm:$0xff]
        %v236 = vld [vmem:[%s2 + $0x10] sm:$0xff]
        %v237 = vld [vmem:[%s2 + $0x18] sm:$0xff]
        %v238 = vld [vmem:[%s2 + $0x20] sm:$0xff]
        %v239 = vld [vmem:[%s2 + $0x28] sm:$0xff]
        %v240 = vld [vmem:[%s2 + $0x30] sm:$0xff]
        %v241 = vld [vmem:[%s2 + $0x38] sm:$0xff]
        %v242 = vld [vmem:[%s2 + $0x40] sm:$0xff]
        %v243 = vld [vmem:[%s2 + $0x48] sm:$0xff]
        %245 = vset.pattern.permute.xlu0 0
        %246 = vperm.xlu0 %245, %v234
        %v247 = vpop.permute.xlu0 %246
        %250 = vset.pattern.permute.xlu0 0
        %251 = vperm.xlu0 %250, %v235
        %v252 = vpop.permute.xlu0 %251
        %255 = vset.pattern.permute.xlu0 0
        %256 = vperm.xlu0 %255, %v236
        %v257 = vpop.permute.xlu0 %256
        %260 = vset.pattern.permute.xlu0 0
        %261 = vperm.xlu0 %260, %v237
        %v262 = vpop.permute.xlu0 %261
        %265 = vset.pattern.permute.xlu0 0
        %266 = vperm.xlu0 %265, %v238
        %v267 = vpop.permute.xlu0 %266
        %270 = vset.pattern.permute.xlu0 0
        %271 = vperm.xlu0 %270, %v239
        %v272 = vpop.permute.xlu0 %271
        %275 = vset.pattern.permute.xlu0 0
        %276 = vperm.xlu0 %275, %v240
        %v277 = vpop.permute.xlu0 %276
        %280 = vset.pattern.permute.xlu0 0
        %281 = vperm.xlu0 %280, %v241
        %v282 = vpop.permute.xlu0 %281
        %285 = vset.pattern.permute.xlu0 0
        %286 = vperm.xlu0 %285, %v242
        %v287 = vpop.permute.xlu0 %286
        %290 = vset.pattern.permute.xlu0 0
        %291 = vperm.xlu0 %290, %v243
        %v292 = vpop.permute.xlu0 %291
        %v294 = vld [vmem:[%s208] sm:$0xff]
        %v295 = vld [vmem:[%s208 + $0x8] sm:$0xff]
        %v296 = vld [vmem:[%s208 + $0x10] sm:$0xff]
        %v297 = vld [vmem:[%s208 + $0x18] sm:$0xff]
        %v298 = vld [vmem:[%s208 + $0x20] sm:$0xff]
        %v299 = vld [vmem:[%s208 + $0x28] sm:$0xff]
        %v300 = vld [vmem:[%s208 + $0x30] sm:$0xff]
        %v301 = vld [vmem:[%s208 + $0x38] sm:$0xff]
        %v302 = vld [vmem:[%s208 + $0x40] sm:$0xff]
        %v303 = vld [vmem:[%s208 + $0x48] sm:$0xff]
        %v304 = vld [vmem:[%s208 + $0x50] sm:$0xff]
        %v305 = vld [vmem:[%s208 + $0x58] sm:$0xff]
        %v306 = vld [vmem:[%s208 + $0x60] sm:$0xff]
        %v307 = vld [vmem:[%s208 + $0x68] sm:$0xff]
        %v308 = vld [vmem:[%s208 + $0x70] sm:$0xff]
        %v309 = vld [vmem:[%s208 + $0x78] sm:$0xff]
        %v310 = vpack.c.bf16 %v296, %v294
        %v311 = vpack.c.bf16 %v297, %v295
        %v312 = vpack.c.bf16 %v300, %v298
        %v313 = vpack.c.bf16 %v301, %v299
        %v314 = vpack.c.bf16 %v304, %v302
        %v315 = vpack.c.bf16 %v305, %v303
        %v316 = vpack.c.bf16 %v308, %v306
        %v317 = vpack.c.bf16 %v309, %v307
        %vm318 = vcmask 523264
        %v320 = vsel %vm318, %v229, 0
        %v323 = vsel %vm318, %v230, 0
        %v326 = vsel %vm318, %v231, 0
        %v329 = vsel %vm318, %v232, 0
        %v332 = vsel %vm318, %v233, 0
        %334 = vmatprep.subr.bf16.mxu0 %v311
        %335 = vmatpush1.bf16.msra.mxu0 %v310
        %336 = vmatprep.subr.bf16.mxu0 %v313
        %337 = vmatpush1.bf16.msra.mxu0 %v312
        %338 = vmatprep.subr.bf16.mxu0 %v315
        %339 = vmatpush1.bf16.msra.mxu0 %v314
        %340 = vmatprep.subr.bf16.mxu0 %v317
        %341 = vmatpush1.bf16.msra.mxu0 %v316
        %342 = vmatprep.subr.bf16.mxu0 0
        %343 = vmatpush1.bf16.msra.mxu0 0
        %344 = vmatprep.subr.bf16.mxu0 0
        %345 = vmatpush1.bf16.msra.mxu0 0
        %346 = vmatprep.subr.bf16.mxu0 0
        %347 = vmatpush1.bf16.msra.mxu0 0
        %348 = vmatprep.subr.bf16.mxu0 0
        %349 = vmatpush1.bf16.msra.mxu0 0
        %350 = vmatprep.subr.bf16.mxu0 0
        %351 = vmatpush1.bf16.msra.mxu0 0
        %352 = vmatprep.subr.bf16.mxu0 0
        %353 = vmatpush1.bf16.msra.mxu0 0
        %354 = vmatprep.subr.bf16.mxu0 0
        %355 = vmatpush1.bf16.msra.mxu0 0
        %356 = vmatprep.subr.bf16.mxu0 0
        %357 = vmatpush1.bf16.msra.mxu0 0
        %358 = vmatprep.subr.bf16.mxu0 0
        %359 = vmatpush1.bf16.msra.mxu0 0
        %360 = vmatprep.subr.bf16.mxu0 0
        %361 = vmatpush1.bf16.msra.mxu0 0
        %362 = vmatprep.subr.bf16.mxu0 0
        %363 = vmatpush1.bf16.msra.mxu0 0
        %364 = vmatprep.subr.bf16.mxu0 0
        %365 = vmatpush1.bf16.msra.mxu0 0
        %366 = vmatprep.mubr.bf16.mxu0 0
        %367 = vmatmul.mubr.bf16.gmra.mrb[0].mxu0 %v320
        %v368 = vpop.f32.mrb[0].mxu0
        %v369 = vadd.f32 %v247, %v368
        %v370 = vpop.f32.mrb[0].mxu0
        %v371 = vadd.f32 %v247, %v370
        %v372 = vpop.f32.mrb[0].mxu0
        %v373 = vadd.f32 %v252, %v372
        %v374 = vpop.f32.mrb[0].mxu0
        %v375 = vadd.f32 %v252, %v374
        %376 = vmatprep.mubr.bf16.mxu0 0
        %377 = vmatmul.mubr.bf16.gmra.mrb[0].mxu0 %v323
        %v378 = vpop.f32.mrb[0].mxu0
        %v379 = vadd.f32 %v257, %v378
        %v380 = vpop.f32.mrb[0].mxu0
        %v381 = vadd.f32 %v257, %v380
        %v382 = vpop.f32.mrb[0].mxu0
        %v383 = vadd.f32 %v262, %v382
        %v384 = vpop.f32.mrb[0].mxu0
        %v385 = vadd.f32 %v262, %v384
        %386 = vmatprep.mubr.bf16.mxu0 0
        %387 = vmatmul.mubr.bf16.gmra.mrb[0].mxu0 %v326
        %v388 = vpop.f32.mrb[0].mxu0
        %v389 = vadd.f32 %v267, %v388
        %v390 = vpop.f32.mrb[0].mxu0
        %v391 = vadd.f32 %v267, %v390
        %v392 = vpop.f32.mrb[0].mxu0
        %v393 = vadd.f32 %v272, %v392
        %v394 = vpop.f32.mrb[0].mxu0
        %v395 = vadd.f32 %v272, %v394
        %396 = vmatprep.mubr.bf16.mxu0 0
        %397 = vmatmul.mubr.bf16.gmra.mrb[0].mxu0 %v329
        %v398 = vpop.f32.mrb[0].mxu0
        %v399 = vadd.f32 %v277, %v398
        %v400 = vpop.f32.mrb[0].mxu0
        %v401 = vadd.f32 %v277, %v400
        %v402 = vpop.f32.mrb[0].mxu0
        %v403 = vadd.f32 %v282, %v402
        %v404 = vpop.f32.mrb[0].mxu0
        %v405 = vadd.f32 %v282, %v404
        %406 = vmatprep.mubr.bf16.mxu0 0
        %407 = vmatmul.mubr.bf16.gmra.mrb[0].mxu0 %v332
        %v408 = vpop.f32.mrb[0].mxu0
        %v409 = vadd.f32 %v287, %v408
        %v410 = vpop.f32.mrb[0].mxu0
        %v411 = vadd.f32 %v287, %v410
        %v412 = vpop.f32.mrb[0].mxu0
        %v413 = vadd.f32 %v292, %v412
        %v414 = vpop.f32.mrb[0].mxu0
        %v415 = vadd.f32 %v292, %v414
        %416 = vdwg.mxu0
        %v417 = vpack.c.bf16 %v409, %v409
        %v418 = vpack.c.bf16 %v411, %v411
        %v419 = vpack.c.bf16 %v413, %v413
        %v420 = vpack.c.bf16 %v415, %v415
        %421 = vxpose.xlu0.c.b16.start [1/8] %v417, 128
        %422 = vxpose.xlu0.c.b16.cont [2/8] 0, 128
        %423 = vxpose.xlu0.c.b16.cont [3/8] 0, 128
        %424 = vxpose.xlu0.c.b16.cont [4/8] 0, 128
        %425 = vxpose.xlu0.c.b16.cont [5/8] 0, 128
        %426 = vxpose.xlu0.c.b16.cont [6/8] 0, 128
        %427 = vxpose.xlu0.c.b16.cont [7/8] 0, 128
        %428 = vxpose.xlu0.c.b16.end [8/8] 0, 128
        %v429 = vpop.trf.xlu0
        %v430 = vpop.trf.xlu0
        %v431 = vpop.trf.xlu0
        %v432 = vpop.trf.xlu0
        %v433 = vpop.trf.xlu0
        %v434 = vpop.trf.xlu0
        %v435 = vpop.trf.xlu0
        %v436 = vpop.trf.xlu0
        %437 = vxpose.xlu0.c.b16.start [1/8] %v418, 128
        %438 = vxpose.xlu0.c.b16.cont [2/8] 0, 128
        %439 = vxpose.xlu0.c.b16.cont [3/8] 0, 128
        %440 = vxpose.xlu0.c.b16.cont [4/8] 0, 128
        %441 = vxpose.xlu0.c.b16.cont [5/8] 0, 128
        %442 = vxpose.xlu0.c.b16.cont [6/8] 0, 128
        %443 = vxpose.xlu0.c.b16.cont [7/8] 0, 128
        %444 = vxpose.xlu0.c.b16.end [8/8] 0, 128
        %v445 = vpop.trf.xlu0
        %v446 = vpop.trf.xlu0
        %v447 = vpop.trf.xlu0
        %v448 = vpop.trf.xlu0
        %v449 = vpop.trf.xlu0
        %v450 = vpop.trf.xlu0
        %v451 = vpop.trf.xlu0
        %v452 = vpop.trf.xlu0
        %vm453 = vcmask 64512
        %v455 = vsel %vm453, %v429, 0
        %v458 = vsel %vm453, %v430, 0
        %v461 = vsel %vm453, %v431, 0
        %v464 = vsel %vm453, %v432, 0
        %v467 = vsel %vm453, %v433, 0
        %v470 = vsel %vm453, %v434, 0
        %v473 = vsel %vm453, %v435, 0
        %v476 = vsel %vm453, %v436, 0
        %v479 = vsel %vm453, %v445, 0
        %v482 = vsel %vm453, %v446, 0
        %v485 = vsel %vm453, %v447, 0
        %v488 = vsel %vm453, %v448, 0
        %v491 = vsel %vm453, %v449, 0
        %v494 = vsel %vm453, %v450, 0
        %v497 = vsel %vm453, %v451, 0
        %v500 = vsel %vm453, %v452, 0
        %vm502 = vcmask 1043456
        %v504 = vsel %vm502, %v419, 0
        %v507 = vsel %vm502, %v420, 0
        %509 = vmatprep.subr.bf16.mxu0 %v507
        %510 = vmatpush1.bf16.msra.mxu0 %v504
        %511 = vmatprep.subr.bf16.mxu0 0
        %512 = vmatpush1.bf16.msra.mxu0 0
        %513 = vmatprep.subr.bf16.mxu0 0
        %514 = vmatpush1.bf16.msra.mxu0 0
        %515 = vmatprep.subr.bf16.mxu0 0
        %516 = vmatpush1.bf16.msra.mxu0 0
        %517 = vmatprep.subr.bf16.mxu0 0
        %518 = vmatpush1.bf16.msra.mxu0 0
        %519 = vmatprep.subr.bf16.mxu0 0
        %520 = vmatpush1.bf16.msra.mxu0 0
        %521 = vmatprep.subr.bf16.mxu0 0
        %522 = vmatpush1.bf16.msra.mxu0 0
        %523 = vmatprep.subr.bf16.mxu0 0
        %524 = vmatpush1.bf16.msra.mxu0 0
        %525 = vmatprep.subr.bf16.mxu0 0
        %526 = vmatpush1.bf16.msra.mxu0 0
        %527 = vmatprep.subr.bf16.mxu0 0
        %528 = vmatpush1.bf16.msra.mxu0 0
        %529 = vmatprep.subr.bf16.mxu0 0
        %530 = vmatpush1.bf16.msra.mxu0 0
        %531 = vmatprep.subr.bf16.mxu0 0
        %532 = vmatpush1.bf16.msra.mxu0 0
        %533 = vmatprep.subr.bf16.mxu0 0
        %534 = vmatpush1.bf16.msra.mxu0 0
        %535 = vmatprep.subr.bf16.mxu0 0
        %536 = vmatpush1.bf16.msra.mxu0 0
        %537 = vmatprep.subr.bf16.mxu0 0
        %538 = vmatpush1.bf16.msra.mxu0 0
        %539 = vmatprep.subr.bf16.mxu0 0
        %540 = vmatpush1.bf16.msra.mxu0 0
        %541 = vmatprep.mubr.bf16.mxu0 0
        %542 = vmatmul.mubr.bf16.gmra.mrb[0].mxu0 %v455
        %v543 = vpop.f32.mrb[0].mxu0
        %v544 = vadd.f32 0.0, %v543
        %v545 = vpop.f32.mrb[0].mxu0
        %v546 = vadd.f32 0.0, %v545
        %v547 = vpop.f32.mrb[0].mxu0
        %v548 = vadd.f32 0.0, %v547
        %v549 = vpop.f32.mrb[0].mxu0
        %v550 = vadd.f32 0.0, %v549
        %551 = vmatprep.mubr.bf16.mxu0 0
        %552 = vmatmul.mubr.bf16.gmra.mrb[0].mxu0 %v458
        %v553 = vpop.f32.mrb[0].mxu0
        %v554 = vadd.f32 0.0, %v553
        %v555 = vpop.f32.mrb[0].mxu0
        %v556 = vadd.f32 0.0, %v555
        %v557 = vpop.f32.mrb[0].mxu0
        %v558 = vadd.f32 0.0, %v557
        %v559 = vpop.f32.mrb[0].mxu0
        %v560 = vadd.f32 0.0, %v559
        %561 = vmatprep.mubr.bf16.mxu0 0
        %562 = vmatmul.mubr.bf16.gmra.mrb[0].mxu0 %v461
        %v563 = vpop.f32.mrb[0].mxu0
        %v564 = vadd.f32 0.0, %v563
        %v565 = vpop.f32.mrb[0].mxu0
        %v566 = vadd.f32 0.0, %v565
        %v567 = vpop.f32.mrb[0].mxu0
        %v568 = vadd.f32 0.0, %v567
        %v569 = vpop.f32.mrb[0].mxu0
        %v570 = vadd.f32 0.0, %v569
        %571 = vmatprep.mubr.bf16.mxu0 0
        %572 = vmatmul.mubr.bf16.gmra.mrb[0].mxu0 %v464
        %v573 = vpop.f32.mrb[0].mxu0
        %v574 = vadd.f32 0.0, %v573
        %v575 = vpop.f32.mrb[0].mxu0
        %v576 = vadd.f32 0.0, %v575
        %v577 = vpop.f32.mrb[0].mxu0
        %v578 = vadd.f32 0.0, %v577
        %v579 = vpop.f32.mrb[0].mxu0
        %v580 = vadd.f32 0.0, %v579
        %581 = vmatprep.mubr.bf16.mxu0 0
        %582 = vmatmul.mubr.bf16.gmra.mrb[0].mxu0 %v467
        %v583 = vpop.f32.mrb[0].mxu0
        %v584 = vadd.f32 0.0, %v583
        %v585 = vpop.f32.mrb[0].mxu0
        %v586 = vadd.f32 0.0, %v585
        %v587 = vpop.f32.mrb[0].mxu0
        %v588 = vadd.f32 0.0, %v587
        %v589 = vpop.f32.mrb[0].mxu0
        %v590 = vadd.f32 0.0, %v589
        %591 = vmatprep.mubr.bf16.mxu0 0
        %592 = vmatmul.mubr.bf16.gmra.mrb[0].mxu0 %v470
        %v593 = vpop.f32.mrb[0].mxu0
        %v594 = vadd.f32 0.0, %v593
        %v595 = vpop.f32.mrb[0].mxu0
        %v596 = vadd.f32 0.0, %v595
        %v597 = vpop.f32.mrb[0].mxu0
        %v598 = vadd.f32 0.0, %v597
        %v599 = vpop.f32.mrb[0].mxu0
        %v600 = vadd.f32 0.0, %v599
        %601 = vmatprep.mubr.bf16.mxu0 0
        %602 = vmatmul.mubr.bf16.gmra.mrb[0].mxu0 %v473
        %v603 = vpop.f32.mrb[0].mxu0
        %v604 = vadd.f32 0.0, %v603
        %v605 = vpop.f32.mrb[0].mxu0
        %v606 = vadd.f32 0.0, %v605
        %v607 = vpop.f32.mrb[0].mxu0
        %v608 = vadd.f32 0.0, %v607
        %v609 = vpop.f32.mrb[0].mxu0
        %v610 = vadd.f32 0.0, %v609
        %611 = vmatprep.mubr.bf16.mxu0 0
        %612 = vmatmul.mubr.bf16.gmra.mrb[0].mxu0 %v476
        %v613 = vpop.f32.mrb[0].mxu0
        %v614 = vadd.f32 0.0, %v613
        %v615 = vpop.f32.mrb[0].mxu0
        %v616 = vadd.f32 0.0, %v615
        %v617 = vpop.f32.mrb[0].mxu0
        %v618 = vadd.f32 0.0, %v617
        %v619 = vpop.f32.mrb[0].mxu0
        %v620 = vadd.f32 0.0, %v619
        %621 = vmatprep.mubr.bf16.mxu0 0
        %622 = vmatmul.mubr.bf16.gmra.mrb[0].mxu0 %v479
        %v623 = vpop.f32.mrb[0].mxu0
        %v624 = vadd.f32 0.0, %v623
        %v625 = vpop.f32.mrb[0].mxu0
        %v626 = vadd.f32 0.0, %v625
        %v627 = vpop.f32.mrb[0].mxu0
        %v628 = vadd.f32 0.0, %v627
        %v629 = vpop.f32.mrb[0].mxu0
        %v630 = vadd.f32 0.0, %v629
        %631 = vmatprep.mubr.bf16.mxu0 0
        %632 = vmatmul.mubr.bf16.gmra.mrb[0].mxu0 %v482
        %v633 = vpop.f32.mrb[0].mxu0
        %v634 = vadd.f32 0.0, %v633
        %v635 = vpop.f32.mrb[0].mxu0
        %v636 = vadd.f32 0.0, %v635
        %v637 = vpop.f32.mrb[0].mxu0
        %v638 = vadd.f32 0.0, %v637
        %v639 = vpop.f32.mrb[0].mxu0
        %v640 = vadd.f32 0.0, %v639
        %641 = vmatprep.mubr.bf16.mxu0 0
        %642 = vmatmul.mubr.bf16.gmra.mrb[0].mxu0 %v485
        %v643 = vpop.f32.mrb[0].mxu0
        %v644 = vadd.f32 0.0, %v643
        %v645 = vpop.f32.mrb[0].mxu0
        %v646 = vadd.f32 0.0, %v645
        %v647 = vpop.f32.mrb[0].mxu0
        %v648 = vadd.f32 0.0, %v647
        %v649 = vpop.f32.mrb[0].mxu0
        %v650 = vadd.f32 0.0, %v649
        %651 = vmatprep.mubr.bf16.mxu0 0
        %652 = vmatmul.mubr.bf16.gmra.mrb[0].mxu0 %v488
        %v653 = vpop.f32.mrb[0].mxu0
        %v654 = vadd.f32 0.0, %v653
        %v655 = vpop.f32.mrb[0].mxu0
        %v656 = vadd.f32 0.0, %v655
        %v657 = vpop.f32.mrb[0].mxu0
        %v658 = vadd.f32 0.0, %v657
        %v659 = vpop.f32.mrb[0].mxu0
        %v660 = vadd.f32 0.0, %v659
        %661 = vmatprep.mubr.bf16.mxu0 0
        %662 = vmatmul.mubr.bf16.gmra.mrb[0].mxu0 %v491
        %v663 = vpop.f32.mrb[0].mxu0
        %v664 = vadd.f32 0.0, %v663
        %v665 = vpop.f32.mrb[0].mxu0
        %v666 = vadd.f32 0.0, %v665
        %v667 = vpop.f32.mrb[0].mxu0
        %v668 = vadd.f32 0.0, %v667
        %v669 = vpop.f32.mrb[0].mxu0
        %v670 = vadd.f32 0.0, %v669
        %671 = vmatprep.mubr.bf16.mxu0 0
        %672 = vmatmul.mubr.bf16.gmra.mrb[0].mxu0 %v494
        %v673 = vpop.f32.mrb[0].mxu0
        %v674 = vadd.f32 0.0, %v673
        %v675 = vpop.f32.mrb[0].mxu0
        %v676 = vadd.f32 0.0, %v675
        %v677 = vpop.f32.mrb[0].mxu0
        %v678 = vadd.f32 0.0, %v677
        %v679 = vpop.f32.mrb[0].mxu0
        %v680 = vadd.f32 0.0, %v679
        %681 = vmatprep.mubr.bf16.mxu0 0
        %682 = vmatmul.mubr.bf16.gmra.mrb[0].mxu0 %v497
        %v683 = vpop.f32.mrb[0].mxu0
        %v684 = vadd.f32 0.0, %v683
        %v685 = vpop.f32.mrb[0].mxu0
        %v686 = vadd.f32 0.0, %v685
        %v687 = vpop.f32.mrb[0].mxu0
        %v688 = vadd.f32 0.0, %v687
        %v689 = vpop.f32.mrb[0].mxu0
        %v690 = vadd.f32 0.0, %v689
        %691 = vmatprep.mubr.bf16.mxu0 0
        %692 = vmatmul.mubr.bf16.gmra.mrb[0].mxu0 %v500
        %v693 = vpop.f32.mrb[0].mxu0
        %v694 = vadd.f32 0.0, %v693
        %v695 = vpop.f32.mrb[0].mxu0
        %v696 = vadd.f32 0.0, %v695
        %v697 = vpop.f32.mrb[0].mxu0
        %v698 = vadd.f32 0.0, %v697
        %v699 = vpop.f32.mrb[0].mxu0
        %v700 = vadd.f32 0.0, %v699
        %701 = vdwg.mxu0
        %v702 = vmax.f32 %v544, %v546
        %703 = vmax.xlane.f32.xlu0 %v702
        %v704 = vpop.xlane.xlu0 %703
        %v705 = vmax.f32 %v548, %v550
        %706 = vmax.xlane.f32.xlu0 %v705
        %v707 = vpop.xlane.xlu0 %706
        %v708 = vmax.f32 %v554, %v556
        %709 = vmax.xlane.f32.xlu0 %v708
        %v710 = vpop.xlane.xlu0 %709
        %v711 = vmax.f32 %v558, %v560
        %712 = vmax.xlane.f32.xlu0 %v711
        %v713 = vpop.xlane.xlu0 %712
        %v714 = vmax.f32 %v564, %v566
        %715 = vmax.xlane.f32.xlu0 %v714
        %v716 = vpop.xlane.xlu0 %715
        %v717 = vmax.f32 %v568, %v570
        %718 = vmax.xlane.f32.xlu0 %v717
        %v719 = vpop.xlane.xlu0 %718
        %v720 = vmax.f32 %v574, %v576
        %721 = vmax.xlane.f32.xlu0 %v720
        %v722 = vpop.xlane.xlu0 %721
        %v723 = vmax.f32 %v578, %v580
        %724 = vmax.xlane.f32.xlu0 %v723
        %v725 = vpop.xlane.xlu0 %724
        %v726 = vmax.f32 %v584, %v586
        %727 = vmax.xlane.f32.xlu0 %v726
        %v728 = vpop.xlane.xlu0 %727
        %v729 = vmax.f32 %v588, %v590
        %730 = vmax.xlane.f32.xlu0 %v729
        %v731 = vpop.xlane.xlu0 %730
        %v732 = vmax.f32 %v594, %v596
        %733 = vmax.xlane.f32.xlu0 %v732
        %v734 = vpop.xlane.xlu0 %733
        %v735 = vmax.f32 %v598, %v600
        %736 = vmax.xlane.f32.xlu0 %v735
        %v737 = vpop.xlane.xlu0 %736
        %v738 = vmax.f32 %v604, %v606
        %739 = vmax.xlane.f32.xlu0 %v738
        %v740 = vpop.xlane.xlu0 %739
        %v741 = vmax.f32 %v608, %v610
        %742 = vmax.xlane.f32.xlu0 %v741
        %v743 = vpop.xlane.xlu0 %742
        %v744 = vmax.f32 %v614, %v616
        %745 = vmax.xlane.f32.xlu0 %v744
        %v746 = vpop.xlane.xlu0 %745
        %v747 = vmax.f32 %v618, %v620
        %748 = vmax.xlane.f32.xlu0 %v747
        %v749 = vpop.xlane.xlu0 %748
        %v750 = vmax.f32 %v624, %v626
        %751 = vmax.xlane.f32.xlu0 %v750
        %v752 = vpop.xlane.xlu0 %751
        %v753 = vmax.f32 %v628, %v630
        %754 = vmax.xlane.f32.xlu0 %v753
        %v755 = vpop.xlane.xlu0 %754
        %v756 = vmax.f32 %v634, %v636
        %757 = vmax.xlane.f32.xlu0 %v756
        %v758 = vpop.xlane.xlu0 %757
        %v759 = vmax.f32 %v638, %v640
        %760 = vmax.xlane.f32.xlu0 %v759
        %v761 = vpop.xlane.xlu0 %760
        %v762 = vmax.f32 %v644, %v646
        %763 = vmax.xlane.f32.xlu0 %v762
        %v764 = vpop.xlane.xlu0 %763
        %v765 = vmax.f32 %v648, %v650
        %766 = vmax.xlane.f32.xlu0 %v765
        %v767 = vpop.xlane.xlu0 %766
        %v768 = vmax.f32 %v654, %v656
        %769 = vmax.xlane.f32.xlu0 %v768
        %v770 = vpop.xlane.xlu0 %769
        %v771 = vmax.f32 %v658, %v660
        %772 = vmax.xlane.f32.xlu0 %v771
        %v773 = vpop.xlane.xlu0 %772
        %v774 = vmax.f32 %v664, %v666
        %775 = vmax.xlane.f32.xlu0 %v774
        %v776 = vpop.xlane.xlu0 %775
        %v777 = vmax.f32 %v668, %v670
        %778 = vmax.xlane.f32.xlu0 %v777
        %v779 = vpop.xlane.xlu0 %778
        %v780 = vmax.f32 %v674, %v676
        %781 = vmax.xlane.f32.xlu0 %v780
        %v782 = vpop.xlane.xlu0 %781
        %v783 = vmax.f32 %v678, %v680
        %784 = vmax.xlane.f32.xlu0 %v783
        %v785 = vpop.xlane.xlu0 %784
        %v786 = vmax.f32 %v684, %v686
        %787 = vmax.xlane.f32.xlu0 %v786
        %v788 = vpop.xlane.xlu0 %787
        %v789 = vmax.f32 %v688, %v690
        %790 = vmax.xlane.f32.xlu0 %v789
        %v791 = vpop.xlane.xlu0 %790
        %v792 = vmax.f32 %v694, %v696
        %793 = vmax.xlane.f32.xlu0 %v792
        %v794 = vpop.xlane.xlu0 %793
        %v795 = vmax.f32 %v698, %v700
        %796 = vmax.xlane.f32.xlu0 %v795
        %v797 = vpop.xlane.xlu0 %796
        %v798 = vsub.f32 %v544, %v704
        %v799 = vsub.f32 %v546, %v704
        %v800 = vsub.f32 %v548, %v707
        %v801 = vsub.f32 %v550, %v707
        %v802 = vsub.f32 %v554, %v710
        %v803 = vsub.f32 %v556, %v710
        %v804 = vsub.f32 %v558, %v713
        %v805 = vsub.f32 %v560, %v713
        %v806 = vsub.f32 %v564, %v716
        %v807 = vsub.f32 %v566, %v716
        %v808 = vsub.f32 %v568, %v719
        %v809 = vsub.f32 %v570, %v719
        %v810 = vsub.f32 %v574, %v722
        %v811 = vsub.f32 %v576, %v722
        %v812 = vsub.f32 %v578, %v725
        %v813 = vsub.f32 %v580, %v725
        %v814 = vsub.f32 %v584, %v728
        %v815 = vsub.f32 %v586, %v728
        %v816 = vsub.f32 %v588, %v731
        %v817 = vsub.f32 %v590, %v731
        %v818 = vsub.f32 %v594, %v734
        %v819 = vsub.f32 %v596, %v734
        %v820 = vsub.f32 %v598, %v737
        %v821 = vsub.f32 %v600, %v737
        %v822 = vsub.f32 %v604, %v740
        %v823 = vsub.f32 %v606, %v740
        %v824 = vsub.f32 %v608, %v743
        %v825 = vsub.f32 %v610, %v743
        %v826 = vsub.f32 %v614, %v746
        %v827 = vsub.f32 %v616, %v746
        %v828 = vsub.f32 %v618, %v749
        %v829 = vsub.f32 %v620, %v749
        %v830 = vsub.f32 %v624, %v752
        %v831 = vsub.f32 %v626, %v752
        %v832 = vsub.f32 %v628, %v755
        %v833 = vsub.f32 %v630, %v755
        %v834 = vsub.f32 %v634, %v758
        %v835 = vsub.f32 %v636, %v758
        %v836 = vsub.f32 %v638, %v761
        %v837 = vsub.f32 %v640, %v761
        %v838 = vsub.f32 %v644, %v764
        %v839 = vsub.f32 %v646, %v764
        %v840 = vsub.f32 %v648, %v767
        %v841 = vsub.f32 %v650, %v767
        %v842 = vsub.f32 %v654, %v770
        %v843 = vsub.f32 %v656, %v770
        %v844 = vsub.f32 %v658, %v773
        %v845 = vsub.f32 %v660, %v773
        %v846 = vsub.f32 %v664, %v776
        %v847 = vsub.f32 %v666, %v776
        %v848 = vsub.f32 %v668, %v779
        %v849 = vsub.f32 %v670, %v779
        %v850 = vsub.f32 %v674, %v782
        %v851 = vsub.f32 %v676, %v782
        %v852 = vsub.f32 %v678, %v785
        %v853 = vsub.f32 %v680, %v785
        %v854 = vsub.f32 %v684, %v788
        %v855 = vsub.f32 %v686, %v788
        %v856 = vsub.f32 %v688, %v791
        %v857 = vsub.f32 %v690, %v791
        %v858 = vsub.f32 %v694, %v794
        %v859 = vsub.f32 %v696, %v794
        %v860 = vsub.f32 %v698, %v797
        %v861 = vsub.f32 %v700, %v797
        %v862 = vmul.f32 %v798, 1.442695
        %v863 = vpow.pop %v862
        %v864 = vmul.f32 %v799, 1.442695
        %v865 = vpow.pop %v864
        %v866 = vmul.f32 %v800, 1.442695
        %v867 = vpow.pop %v866
        %v868 = vmul.f32 %v801, 1.442695
        %v869 = vpow.pop %v868
        %v870 = vmul.f32 %v802, 1.442695
        %v871 = vpow.pop %v870
        %v872 = vmul.f32 %v803, 1.442695
        %v873 = vpow.pop %v872
        %v874 = vmul.f32 %v804, 1.442695
        %v875 = vpow.pop %v874
        %v876 = vmul.f32 %v805, 1.442695
        %v877 = vpow.pop %v876
        %v878 = vmul.f32 %v806, 1.442695
        %v879 = vpow.pop %v878
        %v880 = vmul.f32 %v807, 1.442695
        %v881 = vpow.pop %v880
        %v882 = vmul.f32 %v808, 1.442695
        %v883 = vpow.pop %v882
        %v884 = vmul.f32 %v809, 1.442695
        %v885 = vpow.pop %v884
        %v886 = vmul.f32 %v810, 1.442695
        %v887 = vpow.pop %v886
        %v888 = vmul.f32 %v811, 1.442695
        %v889 = vpow.pop %v888
        %v890 = vmul.f32 %v812, 1.442695
        %v891 = vpow.pop %v890
        %v892 = vmul.f32 %v813, 1.442695
        %v893 = vpow.pop %v892
        %v894 = vmul.f32 %v814, 1.442695
        %v895 = vpow.pop %v894
        %v896 = vmul.f32 %v815, 1.442695
        %v897 = vpow.pop %v896
        %v898 = vmul.f32 %v816, 1.442695
        %v899 = vpow.pop %v898
        %v900 = vmul.f32 %v817, 1.442695
        %v901 = vpow.pop %v900
        %v902 = vmul.f32 %v818, 1.442695
        %v903 = vpow.pop %v902
        %v904 = vmul.f32 %v819, 1.442695
        %v905 = vpow.pop %v904
        %v906 = vmul.f32 %v820, 1.442695
        %v907 = vpow.pop %v906
        %v908 = vmul.f32 %v821, 1.442695
        %v909 = vpow.pop %v908
        %v910 = vmul.f32 %v822, 1.442695
        %v911 = vpow.pop %v910
        %v912 = vmul.f32 %v823, 1.442695
        %v913 = vpow.pop %v912
        %v914 = vmul.f32 %v824, 1.442695
        %v915 = vpow.pop %v914
        %v916 = vmul.f32 %v825, 1.442695
        %v917 = vpow.pop %v916
        %v918 = vmul.f32 %v826, 1.442695
        %v919 = vpow.pop %v918
        %v920 = vmul.f32 %v827, 1.442695
        %v921 = vpow.pop %v920
        %v922 = vmul.f32 %v828, 1.442695
        %v923 = vpow.pop %v922
        %v924 = vmul.f32 %v829, 1.442695
        %v925 = vpow.pop %v924
        %v926 = vmul.f32 %v830, 1.442695
        %v927 = vpow.pop %v926
        %v928 = vmul.f32 %v831, 1.442695
        %v929 = vpow.pop %v928
        %v930 = vmul.f32 %v832, 1.442695
        %v931 = vpow.pop %v930
        %v932 = vmul.f32 %v833, 1.442695
        %v933 = vpow.pop %v932
        %v934 = vmul.f32 %v834, 1.442695
        %v935 = vpow.pop %v934
        %v936 = vmul.f32 %v835, 1.442695
        %v937 = vpow.pop %v936
        %v938 = vmul.f32 %v836, 1.442695
        %v939 = vpow.pop %v938
        %v940 = vmul.f32 %v837, 1.442695
        %v941 = vpow.pop %v940
        %v942 = vmul.f32 %v838, 1.442695
        %v943 = vpow.pop %v942
        %v944 = vmul.f32 %v839, 1.442695
        %v945 = vpow.pop %v944
        %v946 = vmul.f32 %v840, 1.442695
        %v947 = vpow.pop %v946
        %v948 = vmul.f32 %v841, 1.442695
        %v949 = vpow.pop %v948
        %v950 = vmul.f32 %v842, 1.442695
        %v951 = vpow.pop %v950
        %v952 = vmul.f32 %v843, 1.442695
        %v953 = vpow.pop %v952
        %v954 = vmul.f32 %v844, 1.442695
        %v955 = vpow.pop %v954
        %v956 = vmul.f32 %v845, 1.442695
        %v957 = vpow.pop %v956
        %v958 = vmul.f32 %v846, 1.442695
        %v959 = vpow.pop %v958
        %v960 = vmul.f32 %v847, 1.442695
        %v961 = vpow.pop %v960
        %v962 = vmul.f32 %v848, 1.442695
        %v963 = vpow.pop %v962
        %v964 = vmul.f32 %v849, 1.442695
        %v965 = vpow.pop %v964
        %v966 = vmul.f32 %v850, 1.442695
        %v967 = vpow.pop %v966
        %v968 = vmul.f32 %v851, 1.442695
        %v969 = vpow.pop %v968
        %v970 = vmul.f32 %v852, 1.442695
        %v971 = vpow.pop %v970
        %v972 = vmul.f32 %v853, 1.442695
        %v973 = vpow.pop %v972
        %v974 = vmul.f32 %v854, 1.442695
        %v975 = vpow.pop %v974
        %v976 = vmul.f32 %v855, 1.442695
        %v977 = vpow.pop %v976
        %v978 = vmul.f32 %v856, 1.442695
        %v979 = vpow.pop %v978
        %v980 = vmul.f32 %v857, 1.442695
        %v981 = vpow.pop %v980
        %v982 = vmul.f32 %v858, 1.442695
        %v983 = vpow.pop %v982
        %v984 = vmul.f32 %v859, 1.442695
        %v985 = vpow.pop %v984
        %v986 = vmul.f32 %v860, 1.442695
        %v987 = vpow.pop %v986
        %v988 = vmul.f32 %v861, 1.442695
        %v989 = vpow.pop %v988
        %v990 = vadd.f32 %v863, %v865
        %991 = vadd.xlane.f32.xlu0 %v990
        %v992 = vpop.xlane.xlu0 %991
        %v993 = vadd.f32 %v867, %v869
        %994 = vadd.xlane.f32.xlu0 %v993
        %v995 = vpop.xlane.xlu0 %994
        %v996 = vadd.f32 %v871, %v873
        %997 = vadd.xlane.f32.xlu0 %v996
        %v998 = vpop.xlane.xlu0 %997
        %v999 = vadd.f32 %v875, %v877
        %1000 = vadd.xlane.f32.xlu0 %v999
        %v1001 = vpop.xlane.xlu0 %1000
        %v1002 = vadd.f32 %v879, %v881
        %1003 = vadd.xlane.f32.xlu0 %v1002
        %v1004 = vpop.xlane.xlu0 %1003
        %v1005 = vadd.f32 %v883, %v885
        %1006 = vadd.xlane.f32.xlu0 %v1005
        %v1007 = vpop.xlane.xlu0 %1006
        %v1008 = vadd.f32 %v887, %v889
        %1009 = vadd.xlane.f32.xlu0 %v1008
        %v1010 = vpop.xlane.xlu0 %1009
        %v1011 = vadd.f32 %v891, %v893
        %1012 = vadd.xlane.f32.xlu0 %v1011
        %v1013 = vpop.xlane.xlu0 %1012
        %v1014 = vadd.f32 %v895, %v897
        %1015 = vadd.xlane.f32.xlu0 %v1014
        %v1016 = vpop.xlane.xlu0 %1015
        %v1017 = vadd.f32 %v899, %v901
        %1018 = vadd.xlane.f32.xlu0 %v1017
        %v1019 = vpop.xlane.xlu0 %1018
        %v1020 = vadd.f32 %v903, %v905
        %1021 = vadd.xlane.f32.xlu0 %v1020
        %v1022 = vpop.xlane.xlu0 %1021
        %v1023 = vadd.f32 %v907, %v909
        %1024 = vadd.xlane.f32.xlu0 %v1023
        %v1025 = vpop.xlane.xlu0 %1024
        %v1026 = vadd.f32 %v911, %v913
        %1027 = vadd.xlane.f32.xlu0 %v1026
        %v1028 = vpop.xlane.xlu0 %1027
        %v1029 = vadd.f32 %v915, %v917
        %1030 = vadd.xlane.f32.xlu0 %v1029
        %v1031 = vpop.xlane.xlu0 %1030
        %v1032 = vadd.f32 %v919, %v921
        %1033 = vadd.xlane.f32.xlu0 %v1032
        %v1034 = vpop.xlane.xlu0 %1033
        %v1035 = vadd.f32 %v923, %v925
        %1036 = vadd.xlane.f32.xlu0 %v1035
        %v1037 = vpop.xlane.xlu0 %1036
        %v1038 = vadd.f32 %v927, %v929
        %1039 = vadd.xlane.f32.xlu0 %v1038
        %v1040 = vpop.xlane.xlu0 %1039
        %v1041 = vadd.f32 %v931, %v933
        %1042 = vadd.xlane.f32.xlu0 %v1041
        %v1043 = vpop.xlane.xlu0 %1042
        %v1044 = vadd.f32 %v935, %v937
        %1045 = vadd.xlane.f32.xlu0 %v1044
        %v1046 = vpop.xlane.xlu0 %1045
        %v1047 = vadd.f32 %v939, %v941
        %1048 = vadd.xlane.f32.xlu0 %v1047
        %v1049 = vpop.xlane.xlu0 %1048
        %v1050 = vadd.f32 %v943, %v945
        %1051 = vadd.xlane.f32.xlu0 %v1050
        %v1052 = vpop.xlane.xlu0 %1051
        %v1053 = vadd.f32 %v947, %v949
        %1054 = vadd.xlane.f32.xlu0 %v1053
        %v1055 = vpop.xlane.xlu0 %1054
        %v1056 = vadd.f32 %v951, %v953
        %1057 = vadd.xlane.f32.xlu0 %v1056
        %v1058 = vpop.xlane.xlu0 %1057
        %v1059 = vadd.f32 %v955, %v957
        %1060 = vadd.xlane.f32.xlu0 %v1059
        %v1061 = vpop.xlane.xlu0 %1060
        %v1062 = vadd.f32 %v959, %v961
        %1063 = vadd.xlane.f32.xlu0 %v1062
        %v1064 = vpop.xlane.xlu0 %1063
        %v1065 = vadd.f32 %v963, %v965
        %1066 = vadd.xlane.f32.xlu0 %v1065
        %v1067 = vpop.xlane.xlu0 %1066
        %v1068 = vadd.f32 %v967, %v969
        %1069 = vadd.xlane.f32.xlu0 %v1068
        %v1070 = vpop.xlane.xlu0 %1069
        %v1071 = vadd.f32 %v971, %v973
        %1072 = vadd.xlane.f32.xlu0 %v1071
        %v1073 = vpop.xlane.xlu0 %1072
        %v1074 = vadd.f32 %v975, %v977
        %1075 = vadd.xlane.f32.xlu0 %v1074
        %v1076 = vpop.xlane.xlu0 %1075
        %v1077 = vadd.f32 %v979, %v981
        %1078 = vadd.xlane.f32.xlu0 %v1077
        %v1079 = vpop.xlane.xlu0 %1078
        %v1080 = vadd.f32 %v983, %v985
        %1081 = vadd.xlane.f32.xlu0 %v1080
        %v1082 = vpop.xlane.xlu0 %1081
        %v1083 = vadd.f32 %v987, %v989
        %1084 = vadd.xlane.f32.xlu0 %v1083
        %v1085 = vpop.xlane.xlu0 %1084
        %v1086 = vrcp.pop %v992
        %v1087 = vrcp.pop %v995
        %v1088 = vrcp.pop %v998
        %v1089 = vrcp.pop %v1001
        %v1090 = vrcp.pop %v1004
        %v1091 = vrcp.pop %v1007
        %v1092 = vrcp.pop %v1010
        %v1093 = vrcp.pop %v1013
        %v1094 = vrcp.pop %v1016
        %v1095 = vrcp.pop %v1019
        %v1096 = vrcp.pop %v1022
        %v1097 = vrcp.pop %v1025
        %v1098 = vrcp.pop %v1028
        %v1099 = vrcp.pop %v1031
        %v1100 = vrcp.pop %v1034
        %v1101 = vrcp.pop %v1037
        %v1102 = vrcp.pop %v1040
        %v1103 = vrcp.pop %v1043
        %v1104 = vrcp.pop %v1046
        %v1105 = vrcp.pop %v1049
        %v1106 = vrcp.pop %v1052
        %v1107 = vrcp.pop %v1055
        %v1108 = vrcp.pop %v1058
        %v1109 = vrcp.pop %v1061
        %v1110 = vrcp.pop %v1064
        %v1111 = vrcp.pop %v1067
        %v1112 = vrcp.pop %v1070
        %v1113 = vrcp.pop %v1073
        %v1114 = vrcp.pop %v1076
        %v1115 = vrcp.pop %v1079
        %v1116 = vrcp.pop %v1082
        %v1117 = vrcp.pop %v1085
        %v1118 = vmul.f32 %v863, %v1086
        %v1119 = vmul.f32 %v865, %v1086
        %v1120 = vmul.f32 %v867, %v1087
        %v1121 = vmul.f32 %v869, %v1087
        %v1122 = vmul.f32 %v871, %v1088
        %v1123 = vmul.f32 %v873, %v1088
        %v1124 = vmul.f32 %v875, %v1089
        %v1125 = vmul.f32 %v877, %v1089
        %v1126 = vmul.f32 %v879, %v1090
        %v1127 = vmul.f32 %v881, %v1090
        %v1128 = vmul.f32 %v883, %v1091
        %v1129 = vmul.f32 %v885, %v1091
        %v1130 = vmul.f32 %v887, %v1092
        %v1131 = vmul.f32 %v889, %v1092
        %v1132 = vmul.f32 %v891, %v1093
        %v1133 = vmul.f32 %v893, %v1093
        %v1134 = vmul.f32 %v895, %v1094
        %v1135 = vmul.f32 %v897, %v1094
        %v1136 = vmul.f32 %v899, %v1095
        %v1137 = vmul.f32 %v901, %v1095
        %v1138 = vmul.f32 %v903, %v1096
        %v1139 = vmul.f32 %v905, %v1096
        %v1140 = vmul.f32 %v907, %v1097
        %v1141 = vmul.f32 %v909, %v1097
        %v1142 = vmul.f32 %v911, %v1098
        %v1143 = vmul.f32 %v913, %v1098
        %v1144 = vmul.f32 %v915, %v1099
        %v1145 = vmul.f32 %v917, %v1099
        %v1146 = vmul.f32 %v919, %v1100
        %v1147 = vmul.f32 %v921, %v1100
        %v1148 = vmul.f32 %v923, %v1101
        %v1149 = vmul.f32 %v925, %v1101
        %v1150 = vmul.f32 %v927, %v1102
        %v1151 = vmul.f32 %v929, %v1102
        %v1152 = vmul.f32 %v931, %v1103
        %v1153 = vmul.f32 %v933, %v1103
        %v1154 = vmul.f32 %v935, %v1104
        %v1155 = vmul.f32 %v937, %v1104
        %v1156 = vmul.f32 %v939, %v1105
        %v1157 = vmul.f32 %v941, %v1105
        %v1158 = vmul.f32 %v943, %v1106
        %v1159 = vmul.f32 %v945, %v1106
        %v1160 = vmul.f32 %v947, %v1107
        %v1161 = vmul.f32 %v949, %v1107
        %v1162 = vmul.f32 %v951, %v1108
        %v1163 = vmul.f32 %v953, %v1108
        %v1164 = vmul.f32 %v955, %v1109
        %v1165 = vmul.f32 %v957, %v1109
        %v1166 = vmul.f32 %v959, %v1110
        %v1167 = vmul.f32 %v961, %v1110
        %v1168 = vmul.f32 %v963, %v1111
        %v1169 = vmul.f32 %v965, %v1111
        %v1170 = vmul.f32 %v967, %v1112
        %v1171 = vmul.f32 %v969, %v1112
        %v1172 = vmul.f32 %v971, %v1113
        %v1173 = vmul.f32 %v973, %v1113
        %v1174 = vmul.f32 %v975, %v1114
        %v1175 = vmul.f32 %v977, %v1114
        %v1176 = vmul.f32 %v979, %v1115
        %v1177 = vmul.f32 %v981, %v1115
        %v1178 = vmul.f32 %v983, %v1116
        %v1179 = vmul.f32 %v985, %v1116
        %v1180 = vmul.f32 %v987, %v1117
        %v1181 = vmul.f32 %v989, %v1117
        %v1182 = vpack.c.bf16 %v373, %v369
        %v1183 = vpack.c.bf16 %v375, %v371
        %v1184 = vpack.c.bf16 %v383, %v379
        %v1185 = vpack.c.bf16 %v385, %v381
        %v1186 = vpack.c.bf16 %v393, %v389
        %v1187 = vpack.c.bf16 %v395, %v391
        %v1188 = vpack.c.bf16 %v403, %v399
        %v1189 = vpack.c.bf16 %v405, %v401
        %v1190 = vpack.c.bf16 %v1120, %v1118
        %v1191 = vpack.c.bf16 %v1121, %v1119
        %v1192 = vpack.c.bf16 %v1124, %v1122
        %v1193 = vpack.c.bf16 %v1125, %v1123
        %v1194 = vpack.c.bf16 %v1128, %v1126
        %v1195 = vpack.c.bf16 %v1129, %v1127
        %v1196 = vpack.c.bf16 %v1132, %v1130
        %v1197 = vpack.c.bf16 %v1133, %v1131
        %v1198 = vpack.c.bf16 %v1136, %v1134
        %v1199 = vpack.c.bf16 %v1137, %v1135
        %v1200 = vpack.c.bf16 %v1140, %v1138
        %v1201 = vpack.c.bf16 %v1141, %v1139
        %v1202 = vpack.c.bf16 %v1144, %v1142
        %v1203 = vpack.c.bf16 %v1145, %v1143
        %v1204 = vpack.c.bf16 %v1148, %v1146
        %v1205 = vpack.c.bf16 %v1149, %v1147
        %v1206 = vpack.c.bf16 %v1152, %v1150
        %v1207 = vpack.c.bf16 %v1153, %v1151
        %v1208 = vpack.c.bf16 %v1156, %v1154
        %v1209 = vpack.c.bf16 %v1157, %v1155
        %v1210 = vpack.c.bf16 %v1160, %v1158
        %v1211 = vpack.c.bf16 %v1161, %v1159
        %v1212 = vpack.c.bf16 %v1164, %v1162
        %v1213 = vpack.c.bf16 %v1165, %v1163
        %v1214 = vpack.c.bf16 %v1168, %v1166
        %v1215 = vpack.c.bf16 %v1169, %v1167
        %v1216 = vpack.c.bf16 %v1172, %v1170
        %v1217 = vpack.c.bf16 %v1173, %v1171
        %v1218 = vpack.c.bf16 %v1176, %v1174
        %v1219 = vpack.c.bf16 %v1177, %v1175
        %v1220 = vpack.c.bf16 %v1180, %v1178
        %v1221 = vpack.c.bf16 %v1181, %v1179
        %1222 = vmatprep.subr.bf16.mxu0 %v1191
        %1223 = vmatpush1.bf16.xpose.msra.mxu0 %v1190
        %1224 = vmatprep.subr.bf16.mxu0 %v1193
        %1225 = vmatpush1.bf16.xpose.msra.mxu0 %v1192
        %1226 = vmatprep.subr.bf16.mxu0 %v1195
        %1227 = vmatpush1.bf16.xpose.msra.mxu0 %v1194
        %1228 = vmatprep.subr.bf16.mxu0 %v1197
        %1229 = vmatpush1.bf16.xpose.msra.mxu0 %v1196
        %1230 = vmatprep.subr.bf16.mxu0 %v1199
        %1231 = vmatpush1.bf16.xpose.msra.mxu0 %v1198
        %1232 = vmatprep.subr.bf16.mxu0 %v1201
        %1233 = vmatpush1.bf16.xpose.msra.mxu0 %v1200
        %1234 = vmatprep.subr.bf16.mxu0 %v1203
        %1235 = vmatpush1.bf16.xpose.msra.mxu0 %v1202
        %1236 = vmatprep.subr.bf16.mxu0 %v1205
        %1237 = vmatpush1.bf16.xpose.msra.mxu0 %v1204
        %1238 = vmatprep.subr.bf16.mxu0 %v1207
        %1239 = vmatpush1.bf16.xpose.msra.mxu0 %v1206
        %1240 = vmatprep.subr.bf16.mxu0 %v1209
        %1241 = vmatpush1.bf16.xpose.msra.mxu0 %v1208
        %1242 = vmatprep.subr.bf16.mxu0 %v1211
        %1243 = vmatpush1.bf16.xpose.msra.mxu0 %v1210
        %1244 = vmatprep.subr.bf16.mxu0 %v1213
        %1245 = vmatpush1.bf16.xpose.msra.mxu0 %v1212
        %1246 = vmatprep.subr.bf16.mxu0 %v1215
        %1247 = vmatpush1.bf16.xpose.msra.mxu0 %v1214
        %1248 = vmatprep.subr.bf16.mxu0 %v1217
        %1249 = vmatpush1.bf16.xpose.msra.mxu0 %v1216
        %1250 = vmatprep.subr.bf16.mxu0 %v1219
        %1251 = vmatpush1.bf16.xpose.msra.mxu0 %v1218
        %1252 = vmatprep.subr.bf16.mxu0 %v1221
        %1253 = vmatpush1.bf16.xpose.msra.mxu0 %v1220
        %1254 = vmatprep.mubr.bf16.mxu0 %v1183
        %1255 = vmatmul.mubr.bf16.gmra.mrb[0].mxu0 %v1182
        %v1256 = vpop.f32.mrb[0].mxu0
        %v1257 = vadd.f32 0.0, %v1256
        %v1258 = vpop.f32.mrb[0].mxu0
        %v1259 = vadd.f32 0.0, %v1258
        %v1260 = vpop.f32.mrb[0].mxu0
        %v1261 = vadd.f32 0.0, %v1260
        %v1262 = vpop.f32.mrb[0].mxu0
        %v1263 = vadd.f32 0.0, %v1262
        %1264 = vmatprep.mubr.bf16.mxu0 %v1185
        %1265 = vmatmul.mubr.bf16.gmra.mrb[0].mxu0 %v1184
        %v1266 = vpop.f32.mrb[0].mxu0
        %v1267 = vadd.f32 0.0, %v1266
        %v1268 = vpop.f32.mrb[0].mxu0
        %v1269 = vadd.f32 0.0, %v1268
        %v1270 = vpop.f32.mrb[0].mxu0
        %v1271 = vadd.f32 0.0, %v1270
        %v1272 = vpop.f32.mrb[0].mxu0
        %v1273 = vadd.f32 0.0, %v1272
        %1274 = vmatprep.mubr.bf16.mxu0 %v1187
        %1275 = vmatmul.mubr.bf16.gmra.mrb[0].mxu0 %v1186
        %v1276 = vpop.f32.mrb[0].mxu0
        %v1277 = vadd.f32 0.0, %v1276
        %v1278 = vpop.f32.mrb[0].mxu0
        %v1279 = vadd.f32 0.0, %v1278
        %v1280 = vpop.f32.mrb[0].mxu0
        %v1281 = vadd.f32 0.0, %v1280
        %v1282 = vpop.f32.mrb[0].mxu0
        %v1283 = vadd.f32 0.0, %v1282
        %1284 = vmatprep.mubr.bf16.mxu0 %v1189
        %1285 = vmatmul.mubr.bf16.gmra.mrb[0].mxu0 %v1188
        %v1286 = vpop.f32.mrb[0].mxu0
        %v1287 = vadd.f32 0.0, %v1286
        %v1288 = vpop.f32.mrb[0].mxu0
        %v1289 = vadd.f32 0.0, %v1288
        %v1290 = vpop.f32.mrb[0].mxu0
        %v1291 = vadd.f32 0.0, %v1290
        %v1292 = vpop.f32.mrb[0].mxu0
        %v1293 = vadd.f32 0.0, %v1292
        %1294 = vdwg.mxu0
        %1295 = vst [vmem:[%s202] sm:$0xff] %v1118
        %1296 = vst [vmem:[%s202 + $0x8] sm:$0xff] %v1119
        %1297 = vst [vmem:[%s202 + $0x10] sm:$0xff] %v1120
        %1298 = vst [vmem:[%s202 + $0x18] sm:$0xff] %v1121
        %1299 = vst [vmem:[%s202 + $0x20] sm:$0xff] %v1122
        %1300 = vst [vmem:[%s202 + $0x28] sm:$0xff] %v1123
        %1301 = vst [vmem:[%s202 + $0x30] sm:$0xff] %v1124
        %1302 = vst [vmem:[%s202 + $0x38] sm:$0xff] %v1125
        %1303 = vst [vmem:[%s202 + $0x40] sm:$0xff] %v1126
        %1304 = vst [vmem:[%s202 + $0x48] sm:$0xff] %v1127
        %1305 = vst [vmem:[%s202 + $0x50] sm:$0xff] %v1128
        %1306 = vst [vmem:[%s202 + $0x58] sm:$0xff] %v1129
        %1307 = vst [vmem:[%s202 + $0x60] sm:$0xff] %v1130
        %1308 = vst [vmem:[%s202 + $0x68] sm:$0xff] %v1131
        %1309 = vst [vmem:[%s202 + $0x70] sm:$0xff] %v1132
        %1310 = vst [vmem:[%s202 + $0x78] sm:$0xff] %v1133
        %1311 = vst [vmem:[%s202 + $0x80] sm:$0xff] %v1134
        %1312 = vst [vmem:[%s202 + $0x88] sm:$0xff] %v1135
        %1313 = vst [vmem:[%s202 + $0x90] sm:$0xff] %v1136
        %1314 = vst [vmem:[%s202 + $0x98] sm:$0xff] %v1137
        %1315 = vst [vmem:[%s202 + $0xa0] sm:$0xff] %v1138
        %1316 = vst [vmem:[%s202 + $0xa8] sm:$0xff] %v1139
        %1317 = vst [vmem:[%s202 + $0xb0] sm:$0xff] %v1140
        %1318 = vst [vmem:[%s202 + $0xb8] sm:$0xff] %v1141
        %1319 = vst [vmem:[%s202 + $0xc0] sm:$0xff] %v1142
        %1320 = vst [vmem:[%s202 + $0xc8] sm:$0xff] %v1143
        %1321 = vst [vmem:[%s202 + $0xd0] sm:$0xff] %v1144
        %1322 = vst [vmem:[%s202 + $0xd8] sm:$0xff] %v1145
        %1323 = vst [vmem:[%s202 + $0xe0] sm:$0xff] %v1146
        %1324 = vst [vmem:[%s202 + $0xe8] sm:$0xff] %v1147
        %1325 = vst [vmem:[%s202 + $0xf0] sm:$0xff] %v1148
        %1326 = vst [vmem:[%s202 + $0xf8] sm:$0xff] %v1149
        %1327 = vst [vmem:[%s202 + $0x100] sm:$0xff] %v1150
        %1328 = vst [vmem:[%s202 + $0x108] sm:$0xff] %v1151
        %1329 = vst [vmem:[%s202 + $0x110] sm:$0xff] %v1152
        %1330 = vst [vmem:[%s202 + $0x118] sm:$0xff] %v1153
        %1331 = vst [vmem:[%s202 + $0x120] sm:$0xff] %v1154
        %1332 = vst [vmem:[%s202 + $0x128] sm:$0xff] %v1155
        %1333 = vst [vmem:[%s202 + $0x130] sm:$0xff] %v1156
        %1334 = vst [vmem:[%s202 + $0x138] sm:$0xff] %v1157
        %1335 = vst [vmem:[%s202 + $0x140] sm:$0xff] %v1158
        %1336 = vst [vmem:[%s202 + $0x148] sm:$0xff] %v1159
        %1337 = vst [vmem:[%s202 + $0x150] sm:$0xff] %v1160
        %1338 = vst [vmem:[%s202 + $0x158] sm:$0xff] %v1161
        %1339 = vst [vmem:[%s202 + $0x160] sm:$0xff] %v1162
        %1340 = vst [vmem:[%s202 + $0x168] sm:$0xff] %v1163
        %1341 = vst [vmem:[%s202 + $0x170] sm:$0xff] %v1164
        %1342 = vst [vmem:[%s202 + $0x178] sm:$0xff] %v1165
        %1343 = vst [vmem:[%s202 + $0x180] sm:$0xff] %v1166
        %1344 = vst [vmem:[%s202 + $0x188] sm:$0xff] %v1167
        %1345 = vst [vmem:[%s202 + $0x190] sm:$0xff] %v1168
        %1346 = vst [vmem:[%s202 + $0x198] sm:$0xff] %v1169
        %1347 = vst [vmem:[%s202 + $0x1a0] sm:$0xff] %v1170
        %1348 = vst [vmem:[%s202 + $0x1a8] sm:$0xff] %v1171
        %1349 = vst [vmem:[%s202 + $0x1b0] sm:$0xff] %v1172
        %1350 = vst [vmem:[%s202 + $0x1b8] sm:$0xff] %v1173
        %1351 = vst [vmem:[%s202 + $0x1c0] sm:$0xff] %v1174
        %1352 = vst [vmem:[%s202 + $0x1c8] sm:$0xff] %v1175
        %1353 = vst [vmem:[%s202 + $0x1d0] sm:$0xff] %v1176
        %1354 = vst [vmem:[%s202 + $0x1d8] sm:$0xff] %v1177
        %1355 = vst [vmem:[%s202 + $0x1e0] sm:$0xff] %v1178
        %1356 = vst [vmem:[%s202 + $0x1e8] sm:$0xff] %v1179
        %1357 = vst [vmem:[%s202 + $0x1f0] sm:$0xff] %v1180
        %1358 = vst [vmem:[%s202 + $0x1f8] sm:$0xff] %v1181
        %1359 = vst [vmem:[%s215] sm:$0xff] %v1257
        %1360 = vst [vmem:[%s215 + $0x8] sm:$0xff] %v1259
        %1361 = vst [vmem:[%s215 + $0x10] sm:$0xff] %v1261
        %1362 = vst [vmem:[%s215 + $0x18] sm:$0xff] %v1263
        %1363 = vst [vmem:[%s215 + $0x20] sm:$0xff] %v1267
        %1364 = vst [vmem:[%s215 + $0x28] sm:$0xff] %v1269
        %1365 = vst [vmem:[%s215 + $0x30] sm:$0xff] %v1271
        %1366 = vst [vmem:[%s215 + $0x38] sm:$0xff] %v1273
        %1367 = vst [vmem:[%s215 + $0x40] sm:$0xff] %v1277
        %1368 = vst [vmem:[%s215 + $0x48] sm:$0xff] %v1279
        %1369 = vst [vmem:[%s215 + $0x50] sm:$0xff] %v1281
        %1370 = vst [vmem:[%s215 + $0x58] sm:$0xff] %v1283
        %1371 = vst [vmem:[%s215 + $0x60] sm:$0xff] %v1287
        %1372 = vst [vmem:[%s215 + $0x68] sm:$0xff] %v1289
        %1373 = vst [vmem:[%s215 + $0x70] sm:$0xff] %v1291
        %1374 = vst [vmem:[%s215 + $0x78] sm:$0xff] %v1293
        %s1375 = scalar_lea.vmem %s208, 128
        %v1376 = vld [vmem:[%s1375] sm:$0xff]
        %v1377 = vld [vmem:[%s1375 + $0x8] sm:$0xff]
        %v1378 = vld [vmem:[%s1375 + $0x10] sm:$0xff]
        %v1379 = vld [vmem:[%s1375 + $0x18] sm:$0xff]
        %v1380 = vld [vmem:[%s1375 + $0x20] sm:$0xff]
        %v1381 = vld [vmem:[%s1375 + $0x28] sm:$0xff]
        %v1382 = vld [vmem:[%s1375 + $0x30] sm:$0xff]
        %v1383 = vld [vmem:[%s1375 + $0x38] sm:$0xff]
        %v1384 = vld [vmem:[%s1375 + $0x40] sm:$0xff]
        %v1385 = vld [vmem:[%s1375 + $0x48] sm:$0xff]
        %v1386 = vld [vmem:[%s1375 + $0x50] sm:$0xff]
        %v1387 = vld [vmem:[%s1375 + $0x58] sm:$0xff]
        %v1388 = vld [vmem:[%s1375 + $0x60] sm:$0xff]
        %v1389 = vld [vmem:[%s1375 + $0x68] sm:$0xff]
        %v1390 = vld [vmem:[%s1375 + $0x70] sm:$0xff]
        %v1391 = vld [vmem:[%s1375 + $0x78] sm:$0xff]
        %v1392 = vpack.c.bf16 %v1378, %v1376
        %v1393 = vpack.c.bf16 %v1379, %v1377
        %v1394 = vpack.c.bf16 %v1382, %v1380
        %v1395 = vpack.c.bf16 %v1383, %v1381
        %v1396 = vpack.c.bf16 %v1386, %v1384
        %v1397 = vpack.c.bf16 %v1387, %v1385
        %v1398 = vpack.c.bf16 %v1390, %v1388
        %v1399 = vpack.c.bf16 %v1391, %v1389
        %1400 = vmatprep.subr.bf16.mxu0 %v1393
        %1401 = vmatpush1.bf16.msra.mxu0 %v1392
        %1402 = vmatprep.subr.bf16.mxu0 %v1395
        %1403 = vmatpush1.bf16.msra.mxu0 %v1394
        %1404 = vmatprep.subr.bf16.mxu0 %v1397
        %1405 = vmatpush1.bf16.msra.mxu0 %v1396
        %1406 = vmatprep.subr.bf16.mxu0 %v1399
        %1407 = vmatpush1.bf16.msra.mxu0 %v1398
        %1408 = vmatprep.subr.bf16.mxu0 0
        %1409 = vmatpush1.bf16.msra.mxu0 0
        %1410 = vmatprep.subr.bf16.mxu0 0
        %1411 = vmatpush1.bf16.msra.mxu0 0
        %1412 = vmatprep.subr.bf16.mxu0 0
        %1413 = vmatpush1.bf16.msra.mxu0 0
        %1414 = vmatprep.subr.bf16.mxu0 0
        %1415 = vmatpush1.bf16.msra.mxu0 0
        %1416 = vmatprep.subr.bf16.mxu0 0
        %1417 = vmatpush1.bf16.msra.mxu0 0
        %1418 = vmatprep.subr.bf16.mxu0 0
        %1419 = vmatpush1.bf16.msra.mxu0 0
        %1420 = vmatprep.subr.bf16.mxu0 0
        %1421 = vmatpush1.bf16.msra.mxu0 0
        %1422 = vmatprep.subr.bf16.mxu0 0
        %1423 = vmatpush1.bf16.msra.mxu0 0
        %1424 = vmatprep.subr.bf16.mxu0 0
        %1425 = vmatpush1.bf16.msra.mxu0 0
        %1426 = vmatprep.subr.bf16.mxu0 0
        %1427 = vmatpush1.bf16.msra.mxu0 0
        %1428 = vmatprep.subr.bf16.mxu0 0
        %1429 = vmatpush1.bf16.msra.mxu0 0
        %1430 = vmatprep.subr.bf16.mxu0 0
        %1431 = vmatpush1.bf16.msra.mxu0 0
        %1432 = vmatprep.mubr.bf16.mxu0 0
        %1433 = vmatmul.mubr.bf16.gmra.mrb[0].mxu0 %v320
        %v1434 = vpop.f32.mrb[0].mxu0
        %v1435 = vadd.f32 %v247, %v1434
        %v1436 = vpop.f32.mrb[0].mxu0
        %v1437 = vadd.f32 %v247, %v1436
        %v1438 = vpop.f32.mrb[0].mxu0
        %v1439 = vadd.f32 %v252, %v1438
        %v1440 = vpop.f32.mrb[0].mxu0
        %v1441 = vadd.f32 %v252, %v1440
        %1442 = vmatprep.mubr.bf16.mxu0 0
        %1443 = vmatmul.mubr.bf16.gmra.mrb[0].mxu0 %v323
        %v1444 = vpop.f32.mrb[0].mxu0
        %v1445 = vadd.f32 %v257, %v1444
        %v1446 = vpop.f32.mrb[0].mxu0
        %v1447 = vadd.f32 %v257, %v1446
        %v1448 = vpop.f32.mrb[0].mxu0
        %v1449 = vadd.f32 %v262, %v1448
        %v1450 = vpop.f32.mrb[0].mxu0
        %v1451 = vadd.f32 %v262, %v1450
        %1452 = vmatprep.mubr.bf16.mxu0 0
        %1453 = vmatmul.mubr.bf16.gmra.mrb[0].mxu0 %v326
        %v1454 = vpop.f32.mrb[0].mxu0
        %v1455 = vadd.f32 %v267, %v1454
        %v1456 = vpop.f32.mrb[0].mxu0
        %v1457 = vadd.f32 %v267, %v1456
        %v1458 = vpop.f32.mrb[0].mxu0
        %v1459 = vadd.f32 %v272, %v1458
        %v1460 = vpop.f32.mrb[0].mxu0
        %v1461 = vadd.f32 %v272, %v1460
        %1462 = vmatprep.mubr.bf16.mxu0 0
        %1463 = vmatmul.mubr.bf16.gmra.mrb[0].mxu0 %v329
        %v1464 = vpop.f32.mrb[0].mxu0
        %v1465 = vadd.f32 %v277, %v1464
        %v1466 = vpop.f32.mrb[0].mxu0
        %v1467 = vadd.f32 %v277, %v1466
        %v1468 = vpop.f32.mrb[0].mxu0
        %v1469 = vadd.f32 %v282, %v1468
        %v1470 = vpop.f32.mrb[0].mxu0
        %v1471 = vadd.f32 %v282, %v1470
        %1472 = vmatprep.mubr.bf16.mxu0 0
        %1473 = vmatmul.mubr.bf16.gmra.mrb[0].mxu0 %v332
        %v1474 = vpop.f32.mrb[0].mxu0
        %v1475 = vadd.f32 %v287, %v1474
        %v1476 = vpop.f32.mrb[0].mxu0
        %v1477 = vadd.f32 %v287, %v1476
        %v1478 = vpop.f32.mrb[0].mxu0
        %v1479 = vadd.f32 %v292, %v1478
        %v1480 = vpop.f32.mrb[0].mxu0
        %v1481 = vadd.f32 %v292, %v1480
        %1482 = vdwg.mxu0
        %v1483 = vpack.c.bf16 %v1475, %v1475
        %v1484 = vpack.c.bf16 %v1477, %v1477
        %v1485 = vpack.c.bf16 %v1479, %v1479
        %v1486 = vpack.c.bf16 %v1481, %v1481
        %1487 = vxpose.xlu0.c.b16.start [1/8] %v1483, 128
        %1488 = vxpose.xlu0.c.b16.cont [2/8] 0, 128
        %1489 = vxpose.xlu0.c.b16.cont [3/8] 0, 128
        %1490 = vxpose.xlu0.c.b16.cont [4/8] 0, 128
        %1491 = vxpose.xlu0.c.b16.cont [5/8] 0, 128
        %1492 = vxpose.xlu0.c.b16.cont [6/8] 0, 128
        %1493 = vxpose.xlu0.c.b16.cont [7/8] 0, 128
        %1494 = vxpose.xlu0.c.b16.end [8/8] 0, 128
        %v1495 = vpop.trf.xlu0
        %v1496 = vpop.trf.xlu0
        %v1497 = vpop.trf.xlu0
        %v1498 = vpop.trf.xlu0
        %v1499 = vpop.trf.xlu0
        %v1500 = vpop.trf.xlu0
        %v1501 = vpop.trf.xlu0
        %v1502 = vpop.trf.xlu0
        %1503 = vxpose.xlu0.c.b16.start [1/8] %v1484, 128
        %1504 = vxpose.xlu0.c.b16.cont [2/8] 0, 128
        %1505 = vxpose.xlu0.c.b16.cont [3/8] 0, 128
        %1506 = vxpose.xlu0.c.b16.cont [4/8] 0, 128
        %1507 = vxpose.xlu0.c.b16.cont [5/8] 0, 128
        %1508 = vxpose.xlu0.c.b16.cont [6/8] 0, 128
        %1509 = vxpose.xlu0.c.b16.cont [7/8] 0, 128
        %1510 = vxpose.xlu0.c.b16.end [8/8] 0, 128
        %v1511 = vpop.trf.xlu0
        %v1512 = vpop.trf.xlu0
        %v1513 = vpop.trf.xlu0
        %v1514 = vpop.trf.xlu0
        %v1515 = vpop.trf.xlu0
        %v1516 = vpop.trf.xlu0
        %v1517 = vpop.trf.xlu0
        %v1518 = vpop.trf.xlu0
        %v1520 = vsel %vm453, %v1495, 0
        %v1523 = vsel %vm453, %v1496, 0
        %v1526 = vsel %vm453, %v1497, 0
        %v1529 = vsel %vm453, %v1498, 0
        %v1532 = vsel %vm453, %v1499, 0
        %v1535 = vsel %vm453, %v1500, 0
        %v1538 = vsel %vm453, %v1501, 0
        %v1541 = vsel %vm453, %v1502, 0
        %v1544 = vsel %vm453, %v1511, 0
        %v1547 = vsel %vm453, %v1512, 0
        %v1550 = vsel %vm453, %v1513, 0
        %v1553 = vsel %vm453, %v1514, 0
        %v1556 = vsel %vm453, %v1515, 0
        %v1559 = vsel %vm453, %v1516, 0
        %v1562 = vsel %vm453, %v1517, 0
        %v1565 = vsel %vm453, %v1518, 0
        %v1568 = vsel %vm502, %v1485, 0
        %v1571 = vsel %vm502, %v1486, 0
        %1573 = vmatprep.subr.bf16.mxu0 %v1571
        %1574 = vmatpush1.bf16.msra.mxu0 %v1568
        %1575 = vmatprep.subr.bf16.mxu0 0
        %1576 = vmatpush1.bf16.msra.mxu0 0
        %1577 = vmatprep.subr.bf16.mxu0 0
        %1578 = vmatpush1.bf16.msra.mxu0 0
        %1579 = vmatprep.subr.bf16.mxu0 0
        %1580 = vmatpush1.bf16.msra.mxu0 0
        %1581 = vmatprep.subr.bf16.mxu0 0
        %1582 = vmatpush1.bf16.msra.mxu0 0
        %1583 = vmatprep.subr.bf16.mxu0 0
        %1584 = vmatpush1.bf16.msra.mxu0 0
        %1585 = vmatprep.subr.bf16.mxu0 0
        %1586 = vmatpush1.bf16.msra.mxu0 0
        %1587 = vmatprep.subr.bf16.mxu0 0
        %1588 = vmatpush1.bf16.msra.mxu0 0
        %1589 = vmatprep.subr.bf16.mxu0 0
        %1590 = vmatpush1.bf16.msra.mxu0 0
        %1591 = vmatprep.subr.bf16.mxu0 0
        %1592 = vmatpush1.bf16.msra.mxu0 0
        %1593 = vmatprep.subr.bf16.mxu0 0
        %1594 = vmatpush1.bf16.msra.mxu0 0
        %1595 = vmatprep.subr.bf16.mxu0 0
        %1596 = vmatpush1.bf16.msra.mxu0 0
        %1597 = vmatprep.subr.bf16.mxu0 0
        %1598 = vmatpush1.bf16.msra.mxu0 0
        %1599 = vmatprep.subr.bf16.mxu0 0
        %1600 = vmatpush1.bf16.msra.mxu0 0
        %1601 = vmatprep.subr.bf16.mxu0 0
        %1602 = vmatpush1.bf16.msra.mxu0 0
        %1603 = vmatprep.subr.bf16.mxu0 0
        %1604 = vmatpush1.bf16.msra.mxu0 0
        %1605 = vmatprep.mubr.bf16.mxu0 0
        %1606 = vmatmul.mubr.bf16.gmra.mrb[0].mxu0 %v1520
        %v1607 = vpop.f32.mrb[0].mxu0
        %v1608 = vadd.f32 0.0, %v1607
        %v1609 = vpop.f32.mrb[0].mxu0
        %v1610 = vadd.f32 0.0, %v1609
        %v1611 = vpop.f32.mrb[0].mxu0
        %v1612 = vadd.f32 0.0, %v1611
        %v1613 = vpop.f32.mrb[0].mxu0
        %v1614 = vadd.f32 0.0, %v1613
        %1615 = vmatprep.mubr.bf16.mxu0 0
        %1616 = vmatmul.mubr.bf16.gmra.mrb[0].mxu0 %v1523
        %v1617 = vpop.f32.mrb[0].mxu0
        %v1618 = vadd.f32 0.0, %v1617
        %v1619 = vpop.f32.mrb[0].mxu0
        %v1620 = vadd.f32 0.0, %v1619
        %v1621 = vpop.f32.mrb[0].mxu0
        %v1622 = vadd.f32 0.0, %v1621
        %v1623 = vpop.f32.mrb[0].mxu0
        %v1624 = vadd.f32 0.0, %v1623
        %1625 = vmatprep.mubr.bf16.mxu0 0
        %1626 = vmatmul.mubr.bf16.gmra.mrb[0].mxu0 %v1526
        %v1627 = vpop.f32.mrb[0].mxu0
        %v1628 = vadd.f32 0.0, %v1627
        %v1629 = vpop.f32.mrb[0].mxu0
        %v1630 = vadd.f32 0.0, %v1629
        %v1631 = vpop.f32.mrb[0].mxu0
        %v1632 = vadd.f32 0.0, %v1631
        %v1633 = vpop.f32.mrb[0].mxu0
        %v1634 = vadd.f32 0.0, %v1633
        %1635 = vmatprep.mubr.bf16.mxu0 0
        %1636 = vmatmul.mubr.bf16.gmra.mrb[0].mxu0 %v1529
        %v1637 = vpop.f32.mrb[0].mxu0
        %v1638 = vadd.f32 0.0, %v1637
        %v1639 = vpop.f32.mrb[0].mxu0
        %v1640 = vadd.f32 0.0, %v1639
        %v1641 = vpop.f32.mrb[0].mxu0
        %v1642 = vadd.f32 0.0, %v1641
        %v1643 = vpop.f32.mrb[0].mxu0
        %v1644 = vadd.f32 0.0, %v1643
        %1645 = vmatprep.mubr.bf16.mxu0 0
        %1646 = vmatmul.mubr.bf16.gmra.mrb[0].mxu0 %v1532
        %v1647 = vpop.f32.mrb[0].mxu0
        %v1648 = vadd.f32 0.0, %v1647
        %v1649 = vpop.f32.mrb[0].mxu0
        %v1650 = vadd.f32 0.0, %v1649
        %v1651 = vpop.f32.mrb[0].mxu0
        %v1652 = vadd.f32 0.0, %v1651
        %v1653 = vpop.f32.mrb[0].mxu0
        %v1654 = vadd.f32 0.0, %v1653
        %1655 = vmatprep.mubr.bf16.mxu0 0
        %1656 = vmatmul.mubr.bf16.gmra.mrb[0].mxu0 %v1535
        %v1657 = vpop.f32.mrb[0].mxu0
        %v1658 = vadd.f32 0.0, %v1657
        %v1659 = vpop.f32.mrb[0].mxu0
        %v1660 = vadd.f32 0.0, %v1659
        %v1661 = vpop.f32.mrb[0].mxu0
        %v1662 = vadd.f32 0.0, %v1661
        %v1663 = vpop.f32.mrb[0].mxu0
        %v1664 = vadd.f32 0.0, %v1663
        %1665 = vmatprep.mubr.bf16.mxu0 0
        %1666 = vmatmul.mubr.bf16.gmra.mrb[0].mxu0 %v1538
        %v1667 = vpop.f32.mrb[0].mxu0
        %v1668 = vadd.f32 0.0, %v1667
        %v1669 = vpop.f32.mrb[0].mxu0
        %v1670 = vadd.f32 0.0, %v1669
        %v1671 = vpop.f32.mrb[0].mxu0
        %v1672 = vadd.f32 0.0, %v1671
        %v1673 = vpop.f32.mrb[0].mxu0
        %v1674 = vadd.f32 0.0, %v1673
        %1675 = vmatprep.mubr.bf16.mxu0 0
        %1676 = vmatmul.mubr.bf16.gmra.mrb[0].mxu0 %v1541
        %v1677 = vpop.f32.mrb[0].mxu0
        %v1678 = vadd.f32 0.0, %v1677
        %v1679 = vpop.f32.mrb[0].mxu0
        %v1680 = vadd.f32 0.0, %v1679
        %v1681 = vpop.f32.mrb[0].mxu0
        %v1682 = vadd.f32 0.0, %v1681
        %v1683 = vpop.f32.mrb[0].mxu0
        %v1684 = vadd.f32 0.0, %v1683
        %1685 = vmatprep.mubr.bf16.mxu0 0
        %1686 = vmatmul.mubr.bf16.gmra.mrb[0].mxu0 %v1544
        %v1687 = vpop.f32.mrb[0].mxu0
        %v1688 = vadd.f32 0.0, %v1687
        %v1689 = vpop.f32.mrb[0].mxu0
        %v1690 = vadd.f32 0.0, %v1689
        %v1691 = vpop.f32.mrb[0].mxu0
        %v1692 = vadd.f32 0.0, %v1691
        %v1693 = vpop.f32.mrb[0].mxu0
        %v1694 = vadd.f32 0.0, %v1693
        %1695 = vmatprep.mubr.bf16.mxu0 0
        %1696 = vmatmul.mubr.bf16.gmra.mrb[0].mxu0 %v1547
        %v1697 = vpop.f32.mrb[0].mxu0
        %v1698 = vadd.f32 0.0, %v1697
        %v1699 = vpop.f32.mrb[0].mxu0
        %v1700 = vadd.f32 0.0, %v1699
        %v1701 = vpop.f32.mrb[0].mxu0
        %v1702 = vadd.f32 0.0, %v1701
        %v1703 = vpop.f32.mrb[0].mxu0
        %v1704 = vadd.f32 0.0, %v1703
        %1705 = vmatprep.mubr.bf16.mxu0 0
        %1706 = vmatmul.mubr.bf16.gmra.mrb[0].mxu0 %v1550
        %v1707 = vpop.f32.mrb[0].mxu0
        %v1708 = vadd.f32 0.0, %v1707
        %v1709 = vpop.f32.mrb[0].mxu0
        %v1710 = vadd.f32 0.0, %v1709
        %v1711 = vpop.f32.mrb[0].mxu0
        %v1712 = vadd.f32 0.0, %v1711
        %v1713 = vpop.f32.mrb[0].mxu0
        %v1714 = vadd.f32 0.0, %v1713
        %1715 = vmatprep.mubr.bf16.mxu0 0
        %1716 = vmatmul.mubr.bf16.gmra.mrb[0].mxu0 %v1553
        %v1717 = vpop.f32.mrb[0].mxu0
        %v1718 = vadd.f32 0.0, %v1717
        %v1719 = vpop.f32.mrb[0].mxu0
        %v1720 = vadd.f32 0.0, %v1719
        %v1721 = vpop.f32.mrb[0].mxu0
        %v1722 = vadd.f32 0.0, %v1721
        %v1723 = vpop.f32.mrb[0].mxu0
        %v1724 = vadd.f32 0.0, %v1723
        %1725 = vmatprep.mubr.bf16.mxu0 0
        %1726 = vmatmul.mubr.bf16.gmra.mrb[0].mxu0 %v1556
        %v1727 = vpop.f32.mrb[0].mxu0
        %v1728 = vadd.f32 0.0, %v1727
        %v1729 = vpop.f32.mrb[0].mxu0
        %v1730 = vadd.f32 0.0, %v1729
        %v1731 = vpop.f32.mrb[0].mxu0
        %v1732 = vadd.f32 0.0, %v1731
        %v1733 = vpop.f32.mrb[0].mxu0
        %v1734 = vadd.f32 0.0, %v1733
        %1735 = vmatprep.mubr.bf16.mxu0 0
        %1736 = vmatmul.mubr.bf16.gmra.mrb[0].mxu0 %v1559
        %v1737 = vpop.f32.mrb[0].mxu0
        %v1738 = vadd.f32 0.0, %v1737
        %v1739 = vpop.f32.mrb[0].mxu0
        %v1740 = vadd.f32 0.0, %v1739
        %v1741 = vpop.f32.mrb[0].mxu0
        %v1742 = vadd.f32 0.0, %v1741
        %v1743 = vpop.f32.mrb[0].mxu0
        %v1744 = vadd.f32 0.0, %v1743
        %1745 = vmatprep.mubr.bf16.mxu0 0
        %1746 = vmatmul.mubr.bf16.gmra.mrb[0].mxu0 %v1562
        %v1747 = vpop.f32.mrb[0].mxu0
        %v1748 = vadd.f32 0.0, %v1747
        %v1749 = vpop.f32.mrb[0].mxu0
        %v1750 = vadd.f32 0.0, %v1749
        %v1751 = vpop.f32.mrb[0].mxu0
        %v1752 = vadd.f32 0.0, %v1751
        %v1753 = vpop.f32.mrb[0].mxu0
        %v1754 = vadd.f32 0.0, %v1753
        %1755 = vmatprep.mubr.bf16.mxu0 0
        %1756 = vmatmul.mubr.bf16.gmra.mrb[0].mxu0 %v1565
        %v1757 = vpop.f32.mrb[0].mxu0
        %v1758 = vadd.f32 0.0, %v1757
        %v1759 = vpop.f32.mrb[0].mxu0
        %v1760 = vadd.f32 0.0, %v1759
        %v1761 = vpop.f32.mrb[0].mxu0
        %v1762 = vadd.f32 0.0, %v1761
        %v1763 = vpop.f32.mrb[0].mxu0
        %v1764 = vadd.f32 0.0, %v1763
        %1765 = vdwg.mxu0
        %v1766 = vmax.f32 %v1608, %v1610
        %1767 = vmax.xlane.f32.xlu0 %v1766
        %v1768 = vpop.xlane.xlu0 %1767
        %v1769 = vmax.f32 %v1612, %v1614
        %1770 = vmax.xlane.f32.xlu0 %v1769
        %v1771 = vpop.xlane.xlu0 %1770
        %v1772 = vmax.f32 %v1618, %v1620
        %1773 = vmax.xlane.f32.xlu0 %v1772
        %v1774 = vpop.xlane.xlu0 %1773
        %v1775 = vmax.f32 %v1622, %v1624
        %1776 = vmax.xlane.f32.xlu0 %v1775
        %v1777 = vpop.xlane.xlu0 %1776
        %v1778 = vmax.f32 %v1628, %v1630
        %1779 = vmax.xlane.f32.xlu0 %v1778
        %v1780 = vpop.xlane.xlu0 %1779
        %v1781 = vmax.f32 %v1632, %v1634
        %1782 = vmax.xlane.f32.xlu0 %v1781
        %v1783 = vpop.xlane.xlu0 %1782
        %v1784 = vmax.f32 %v1638, %v1640
        %1785 = vmax.xlane.f32.xlu0 %v1784
        %v1786 = vpop.xlane.xlu0 %1785
        %v1787 = vmax.f32 %v1642, %v1644
        %1788 = vmax.xlane.f32.xlu0 %v1787
        %v1789 = vpop.xlane.xlu0 %1788
        %v1790 = vmax.f32 %v1648, %v1650
        %1791 = vmax.xlane.f32.xlu0 %v1790
        %v1792 = vpop.xlane.xlu0 %1791
        %v1793 = vmax.f32 %v1652, %v1654
        %1794 = vmax.xlane.f32.xlu0 %v1793
        %v1795 = vpop.xlane.xlu0 %1794
        %v1796 = vmax.f32 %v1658, %v1660
        %1797 = vmax.xlane.f32.xlu0 %v1796
        %v1798 = vpop.xlane.xlu0 %1797
        %v1799 = vmax.f32 %v1662, %v1664
        %1800 = vmax.xlane.f32.xlu0 %v1799
        %v1801 = vpop.xlane.xlu0 %1800
        %v1802 = vmax.f32 %v1668, %v1670
        %1803 = vmax.xlane.f32.xlu0 %v1802
        %v1804 = vpop.xlane.xlu0 %1803
        %v1805 = vmax.f32 %v1672, %v1674
        %1806 = vmax.xlane.f32.xlu0 %v1805
        %v1807 = vpop.xlane.xlu0 %1806
        %v1808 = vmax.f32 %v1678, %v1680
        %1809 = vmax.xlane.f32.xlu0 %v1808
        %v1810 = vpop.xlane.xlu0 %1809
        %v1811 = vmax.f32 %v1682, %v1684
        %1812 = vmax.xlane.f32.xlu0 %v1811
        %v1813 = vpop.xlane.xlu0 %1812
        %v1814 = vmax.f32 %v1688, %v1690
        %1815 = vmax.xlane.f32.xlu0 %v1814
        %v1816 = vpop.xlane.xlu0 %1815
        %v1817 = vmax.f32 %v1692, %v1694
        %1818 = vmax.xlane.f32.xlu0 %v1817
        %v1819 = vpop.xlane.xlu0 %1818
        %v1820 = vmax.f32 %v1698, %v1700
        %1821 = vmax.xlane.f32.xlu0 %v1820
        %v1822 = vpop.xlane.xlu0 %1821
        %v1823 = vmax.f32 %v1702, %v1704
        %1824 = vmax.xlane.f32.xlu0 %v1823
        %v1825 = vpop.xlane.xlu0 %1824
        %v1826 = vmax.f32 %v1708, %v1710
        %1827 = vmax.xlane.f32.xlu0 %v1826
        %v1828 = vpop.xlane.xlu0 %1827
        %v1829 = vmax.f32 %v1712, %v1714
        %1830 = vmax.xlane.f32.xlu0 %v1829
        %v1831 = vpop.xlane.xlu0 %1830
        %v1832 = vmax.f32 %v1718, %v1720
        %1833 = vmax.xlane.f32.xlu0 %v1832
        %v1834 = vpop.xlane.xlu0 %1833
        %v1835 = vmax.f32 %v1722, %v1724
        %1836 = vmax.xlane.f32.xlu0 %v1835
        %v1837 = vpop.xlane.xlu0 %1836
        %v1838 = vmax.f32 %v1728, %v1730
        %1839 = vmax.xlane.f32.xlu0 %v1838
        %v1840 = vpop.xlane.xlu0 %1839
        %v1841 = vmax.f32 %v1732, %v1734
        %1842 = vmax.xlane.f32.xlu0 %v1841
        %v1843 = vpop.xlane.xlu0 %1842
        %v1844 = vmax.f32 %v1738, %v1740
        %1845 = vmax.xlane.f32.xlu0 %v1844
        %v1846 = vpop.xlane.xlu0 %1845
        %v1847 = vmax.f32 %v1742, %v1744
        %1848 = vmax.xlane.f32.xlu0 %v1847
        %v1849 = vpop.xlane.xlu0 %1848
        %v1850 = vmax.f32 %v1748, %v1750
        %1851 = vmax.xlane.f32.xlu0 %v1850
        %v1852 = vpop.xlane.xlu0 %1851
        %v1853 = vmax.f32 %v1752, %v1754
        %1854 = vmax.xlane.f32.xlu0 %v1853
        %v1855 = vpop.xlane.xlu0 %1854
        %v1856 = vmax.f32 %v1758, %v1760
        %1857 = vmax.xlane.f32.xlu0 %v1856
        %v1858 = vpop.xlane.xlu0 %1857
        %v1859 = vmax.f32 %v1762, %v1764
        %1860 = vmax.xlane.f32.xlu0 %v1859
        %v1861 = vpop.xlane.xlu0 %1860
        %v1862 = vsub.f32 %v1608, %v1768
        %v1863 = vsub.f32 %v1610, %v1768
        %v1864 = vsub.f32 %v1612, %v1771
        %v1865 = vsub.f32 %v1614, %v1771
        %v1866 = vsub.f32 %v1618, %v1774
        %v1867 = vsub.f32 %v1620, %v1774
        %v1868 = vsub.f32 %v1622, %v1777
        %v1869 = vsub.f32 %v1624, %v1777
        %v1870 = vsub.f32 %v1628, %v1780
        %v1871 = vsub.f32 %v1630, %v1780
        %v1872 = vsub.f32 %v1632, %v1783
        %v1873 = vsub.f32 %v1634, %v1783
        %v1874 = vsub.f32 %v1638, %v1786
        %v1875 = vsub.f32 %v1640, %v1786
        %v1876 = vsub.f32 %v1642, %v1789
        %v1877 = vsub.f32 %v1644, %v1789
        %v1878 = vsub.f32 %v1648, %v1792
        %v1879 = vsub.f32 %v1650, %v1792
        %v1880 = vsub.f32 %v1652, %v1795
        %v1881 = vsub.f32 %v1654, %v1795
        %v1882 = vsub.f32 %v1658, %v1798
        %v1883 = vsub.f32 %v1660, %v1798
        %v1884 = vsub.f32 %v1662, %v1801
        %v1885 = vsub.f32 %v1664, %v1801
        %v1886 = vsub.f32 %v1668, %v1804
        %v1887 = vsub.f32 %v1670, %v1804
        %v1888 = vsub.f32 %v1672, %v1807
        %v1889 = vsub.f32 %v1674, %v1807
        %v1890 = vsub.f32 %v1678, %v1810
        %v1891 = vsub.f32 %v1680, %v1810
        %v1892 = vsub.f32 %v1682, %v1813
        %v1893 = vsub.f32 %v1684, %v1813
        %v1894 = vsub.f32 %v1688, %v1816
        %v1895 = vsub.f32 %v1690, %v1816
        %v1896 = vsub.f32 %v1692, %v1819
        %v1897 = vsub.f32 %v1694, %v1819
        %v1898 = vsub.f32 %v1698, %v1822
        %v1899 = vsub.f32 %v1700, %v1822
        %v1900 = vsub.f32 %v1702, %v1825
        %v1901 = vsub.f32 %v1704, %v1825
        %v1902 = vsub.f32 %v1708, %v1828
        %v1903 = vsub.f32 %v1710, %v1828
        %v1904 = vsub.f32 %v1712, %v1831
        %v1905 = vsub.f32 %v1714, %v1831
        %v1906 = vsub.f32 %v1718, %v1834
        %v1907 = vsub.f32 %v1720, %v1834
        %v1908 = vsub.f32 %v1722, %v1837
        %v1909 = vsub.f32 %v1724, %v1837
        %v1910 = vsub.f32 %v1728, %v1840
        %v1911 = vsub.f32 %v1730, %v1840
        %v1912 = vsub.f32 %v1732, %v1843
        %v1913 = vsub.f32 %v1734, %v1843
        %v1914 = vsub.f32 %v1738, %v1846
        %v1915 = vsub.f32 %v1740, %v1846
        %v1916 = vsub.f32 %v1742, %v1849
        %v1917 = vsub.f32 %v1744, %v1849
        %v1918 = vsub.f32 %v1748, %v1852
        %v1919 = vsub.f32 %v1750, %v1852
        %v1920 = vsub.f32 %v1752, %v1855
        %v1921 = vsub.f32 %v1754, %v1855
        %v1922 = vsub.f32 %v1758, %v1858
        %v1923 = vsub.f32 %v1760, %v1858
        %v1924 = vsub.f32 %v1762, %v1861
        %v1925 = vsub.f32 %v1764, %v1861
        %v1926 = vmul.f32 %v1862, 1.442695
        %v1927 = vpow.pop %v1926
        %v1928 = vmul.f32 %v1863, 1.442695
        %v1929 = vpow.pop %v1928
        %v1930 = vmul.f32 %v1864, 1.442695
        %v1931 = vpow.pop %v1930
        %v1932 = vmul.f32 %v1865, 1.442695
        %v1933 = vpow.pop %v1932
        %v1934 = vmul.f32 %v1866, 1.442695
        %v1935 = vpow.pop %v1934
        %v1936 = vmul.f32 %v1867, 1.442695
        %v1937 = vpow.pop %v1936
        %v1938 = vmul.f32 %v1868, 1.442695
        %v1939 = vpow.pop %v1938
        %v1940 = vmul.f32 %v1869, 1.442695
        %v1941 = vpow.pop %v1940
        %v1942 = vmul.f32 %v1870, 1.442695
        %v1943 = vpow.pop %v1942
        %v1944 = vmul.f32 %v1871, 1.442695
        %v1945 = vpow.pop %v1944
        %v1946 = vmul.f32 %v1872, 1.442695
        %v1947 = vpow.pop %v1946
        %v1948 = vmul.f32 %v1873, 1.442695
        %v1949 = vpow.pop %v1948
        %v1950 = vmul.f32 %v1874, 1.442695
        %v1951 = vpow.pop %v1950
        %v1952 = vmul.f32 %v1875, 1.442695
        %v1953 = vpow.pop %v1952
        %v1954 = vmul.f32 %v1876, 1.442695
        %v1955 = vpow.pop %v1954
        %v1956 = vmul.f32 %v1877, 1.442695
        %v1957 = vpow.pop %v1956
        %v1958 = vmul.f32 %v1878, 1.442695
        %v1959 = vpow.pop %v1958
        %v1960 = vmul.f32 %v1879, 1.442695
        %v1961 = vpow.pop %v1960
        %v1962 = vmul.f32 %v1880, 1.442695
        %v1963 = vpow.pop %v1962
        %v1964 = vmul.f32 %v1881, 1.442695
        %v1965 = vpow.pop %v1964
        %v1966 = vmul.f32 %v1882, 1.442695
        %v1967 = vpow.pop %v1966
        %v1968 = vmul.f32 %v1883, 1.442695
        %v1969 = vpow.pop %v1968
        %v1970 = vmul.f32 %v1884, 1.442695
        %v1971 = vpow.pop %v1970
        %v1972 = vmul.f32 %v1885, 1.442695
        %v1973 = vpow.pop %v1972
        %v1974 = vmul.f32 %v1886, 1.442695
        %v1975 = vpow.pop %v1974
        %v1976 = vmul.f32 %v1887, 1.442695
        %v1977 = vpow.pop %v1976
        %v1978 = vmul.f32 %v1888, 1.442695
        %v1979 = vpow.pop %v1978
        %v1980 = vmul.f32 %v1889, 1.442695
        %v1981 = vpow.pop %v1980
        %v1982 = vmul.f32 %v1890, 1.442695
        %v1983 = vpow.pop %v1982
        %v1984 = vmul.f32 %v1891, 1.442695
        %v1985 = vpow.pop %v1984
        %v1986 = vmul.f32 %v1892, 1.442695
        %v1987 = vpow.pop %v1986
        %v1988 = vmul.f32 %v1893, 1.442695
        %v1989 = vpow.pop %v1988
        %v1990 = vmul.f32 %v1894, 1.442695
        %v1991 = vpow.pop %v1990
        %v1992 = vmul.f32 %v1895, 1.442695
        %v1993 = vpow.pop %v1992
        %v1994 = vmul.f32 %v1896, 1.442695
        %v1995 = vpow.pop %v1994
        %v1996 = vmul.f32 %v1897, 1.442695
        %v1997 = vpow.pop %v1996
        %v1998 = vmul.f32 %v1898, 1.442695
        %v1999 = vpow.pop %v1998
        %v2000 = vmul.f32 %v1899, 1.442695
        %v2001 = vpow.pop %v2000
        %v2002 = vmul.f32 %v1900, 1.442695
        %v2003 = vpow.pop %v2002
        %v2004 = vmul.f32 %v1901, 1.442695
        %v2005 = vpow.pop %v2004
        %v2006 = vmul.f32 %v1902, 1.442695
        %v2007 = vpow.pop %v2006
        %v2008 = vmul.f32 %v1903, 1.442695
        %v2009 = vpow.pop %v2008
        %v2010 = vmul.f32 %v1904, 1.442695
        %v2011 = vpow.pop %v2010
        %v2012 = vmul.f32 %v1905, 1.442695
        %v2013 = vpow.pop %v2012
        %v2014 = vmul.f32 %v1906, 1.442695
        %v2015 = vpow.pop %v2014
        %v2016 = vmul.f32 %v1907, 1.442695
        %v2017 = vpow.pop %v2016
        %v2018 = vmul.f32 %v1908, 1.442695
        %v2019 = vpow.pop %v2018
        %v2020 = vmul.f32 %v1909, 1.442695
        %v2021 = vpow.pop %v2020
        %v2022 = vmul.f32 %v1910, 1.442695
        %v2023 = vpow.pop %v2022
        %v2024 = vmul.f32 %v1911, 1.442695
        %v2025 = vpow.pop %v2024
        %v2026 = vmul.f32 %v1912, 1.442695
        %v2027 = vpow.pop %v2026
        %v2028 = vmul.f32 %v1913, 1.442695
        %v2029 = vpow.pop %v2028
        %v2030 = vmul.f32 %v1914, 1.442695
        %v2031 = vpow.pop %v2030
        %v2032 = vmul.f32 %v1915, 1.442695
        %v2033 = vpow.pop %v2032
        %v2034 = vmul.f32 %v1916, 1.442695
        %v2035 = vpow.pop %v2034
        %v2036 = vmul.f32 %v1917, 1.442695
        %v2037 = vpow.pop %v2036
        %v2038 = vmul.f32 %v1918, 1.442695
        %v2039 = vpow.pop %v2038
        %v2040 = vmul.f32 %v1919, 1.442695
        %v2041 = vpow.pop %v2040
        %v2042 = vmul.f32 %v1920, 1.442695
        %v2043 = vpow.pop %v2042
        %v2044 = vmul.f32 %v1921, 1.442695
        %v2045 = vpow.pop %v2044
        %v2046 = vmul.f32 %v1922, 1.442695
        %v2047 = vpow.pop %v2046
        %v2048 = vmul.f32 %v1923, 1.442695
        %v2049 = vpow.pop %v2048
        %v2050 = vmul.f32 %v1924, 1.442695
        %v2051 = vpow.pop %v2050
        %v2052 = vmul.f32 %v1925, 1.442695
        %v2053 = vpow.pop %v2052
        %v2054 = vadd.f32 %v1927, %v1929
        %2055 = vadd.xlane.f32.xlu0 %v2054
        %v2056 = vpop.xlane.xlu0 %2055
        %v2057 = vadd.f32 %v1931, %v1933
        %2058 = vadd.xlane.f32.xlu0 %v2057
        %v2059 = vpop.xlane.xlu0 %2058
        %v2060 = vadd.f32 %v1935, %v1937
        %2061 = vadd.xlane.f32.xlu0 %v2060
        %v2062 = vpop.xlane.xlu0 %2061
        %v2063 = vadd.f32 %v1939, %v1941
        %2064 = vadd.xlane.f32.xlu0 %v2063
        %v2065 = vpop.xlane.xlu0 %2064
        %v2066 = vadd.f32 %v1943, %v1945
        %2067 = vadd.xlane.f32.xlu0 %v2066
        %v2068 = vpop.xlane.xlu0 %2067
        %v2069 = vadd.f32 %v1947, %v1949
        %2070 = vadd.xlane.f32.xlu0 %v2069
        %v2071 = vpop.xlane.xlu0 %2070
        %v2072 = vadd.f32 %v1951, %v1953
        %2073 = vadd.xlane.f32.xlu0 %v2072
        %v2074 = vpop.xlane.xlu0 %2073
        %v2075 = vadd.f32 %v1955, %v1957
        %2076 = vadd.xlane.f32.xlu0 %v2075
        %v2077 = vpop.xlane.xlu0 %2076
        %v2078 = vadd.f32 %v1959, %v1961
        %2079 = vadd.xlane.f32.xlu0 %v2078
        %v2080 = vpop.xlane.xlu0 %2079
        %v2081 = vadd.f32 %v1963, %v1965
        %2082 = vadd.xlane.f32.xlu0 %v2081
        %v2083 = vpop.xlane.xlu0 %2082
        %v2084 = vadd.f32 %v1967, %v1969
        %2085 = vadd.xlane.f32.xlu0 %v2084
        %v2086 = vpop.xlane.xlu0 %2085
        %v2087 = vadd.f32 %v1971, %v1973
        %2088 = vadd.xlane.f32.xlu0 %v2087
        %v2089 = vpop.xlane.xlu0 %2088
        %v2090 = vadd.f32 %v1975, %v1977
        %2091 = vadd.xlane.f32.xlu0 %v2090
        %v2092 = vpop.xlane.xlu0 %2091
        %v2093 = vadd.f32 %v1979, %v1981
        %2094 = vadd.xlane.f32.xlu0 %v2093
        %v2095 = vpop.xlane.xlu0 %2094
        %v2096 = vadd.f32 %v1983, %v1985
        %2097 = vadd.xlane.f32.xlu0 %v2096
        %v2098 = vpop.xlane.xlu0 %2097
        %v2099 = vadd.f32 %v1987, %v1989
        %2100 = vadd.xlane.f32.xlu0 %v2099
        %v2101 = vpop.xlane.xlu0 %2100
        %v2102 = vadd.f32 %v1991, %v1993
        %2103 = vadd.xlane.f32.xlu0 %v2102
        %v2104 = vpop.xlane.xlu0 %2103
        %v2105 = vadd.f32 %v1995, %v1997
        %2106 = vadd.xlane.f32.xlu0 %v2105
        %v2107 = vpop.xlane.xlu0 %2106
        %v2108 = vadd.f32 %v1999, %v2001
        %2109 = vadd.xlane.f32.xlu0 %v2108
        %v2110 = vpop.xlane.xlu0 %2109
        %v2111 = vadd.f32 %v2003, %v2005
        %2112 = vadd.xlane.f32.xlu0 %v2111
        %v2113 = vpop.xlane.xlu0 %2112
        %v2114 = vadd.f32 %v2007, %v2009
        %2115 = vadd.xlane.f32.xlu0 %v2114
        %v2116 = vpop.xlane.xlu0 %2115
        %v2117 = vadd.f32 %v2011, %v2013
        %2118 = vadd.xlane.f32.xlu0 %v2117
        %v2119 = vpop.xlane.xlu0 %2118
        %v2120 = vadd.f32 %v2015, %v2017
        %2121 = vadd.xlane.f32.xlu0 %v2120
        %v2122 = vpop.xlane.xlu0 %2121
        %v2123 = vadd.f32 %v2019, %v2021
        %2124 = vadd.xlane.f32.xlu0 %v2123
        %v2125 = vpop.xlane.xlu0 %2124
        %v2126 = vadd.f32 %v2023, %v2025
        %2127 = vadd.xlane.f32.xlu0 %v2126
        %v2128 = vpop.xlane.xlu0 %2127
        %v2129 = vadd.f32 %v2027, %v2029
        %2130 = vadd.xlane.f32.xlu0 %v2129
        %v2131 = vpop.xlane.xlu0 %2130
        %v2132 = vadd.f32 %v2031, %v2033
        %2133 = vadd.xlane.f32.xlu0 %v2132
        %v2134 = vpop.xlane.xlu0 %2133
        %v2135 = vadd.f32 %v2035, %v2037
        %2136 = vadd.xlane.f32.xlu0 %v2135
        %v2137 = vpop.xlane.xlu0 %2136
        %v2138 = vadd.f32 %v2039, %v2041
        %2139 = vadd.xlane.f32.xlu0 %v2138
        %v2140 = vpop.xlane.xlu0 %2139
        %v2141 = vadd.f32 %v2043, %v2045
        %2142 = vadd.xlane.f32.xlu0 %v2141
        %v2143 = vpop.xlane.xlu0 %2142
        %v2144 = vadd.f32 %v2047, %v2049
        %2145 = vadd.xlane.f32.xlu0 %v2144
        %v2146 = vpop.xlane.xlu0 %2145
        %v2147 = vadd.f32 %v2051, %v2053
        %2148 = vadd.xlane.f32.xlu0 %v2147
        %v2149 = vpop.xlane.xlu0 %2148
        %v2150 = vrcp.pop %v2056
        %v2151 = vrcp.pop %v2059
        %v2152 = vrcp.pop %v2062
        %v2153 = vrcp.pop %v2065
        %v2154 = vrcp.pop %v2068
        %v2155 = vrcp.pop %v2071
        %v2156 = vrcp.pop %v2074
        %v2157 = vrcp.pop %v2077
        %v2158 = vrcp.pop %v2080
        %v2159 = vrcp.pop %v2083
        %v2160 = vrcp.pop %v2086
        %v2161 = vrcp.pop %v2089
        %v2162 = vrcp.pop %v2092
        %v2163 = vrcp.pop %v2095
        %v2164 = vrcp.pop %v2098
        %v2165 = vrcp.pop %v2101
        %v2166 = vrcp.pop %v2104
        %v2167 = vrcp.pop %v2107
        %v2168 = vrcp.pop %v2110
        %v2169 = vrcp.pop %v2113
        %v2170 = vrcp.pop %v2116
        %v2171 = vrcp.pop %v2119
        %v2172 = vrcp.pop %v2122
        %v2173 = vrcp.pop %v2125
        %v2174 = vrcp.pop %v2128
        %v2175 = vrcp.pop %v2131
        %v2176 = vrcp.pop %v2134
        %v2177 = vrcp.pop %v2137
        %v2178 = vrcp.pop %v2140
        %v2179 = vrcp.pop %v2143
        %v2180 = vrcp.pop %v2146
        %v2181 = vrcp.pop %v2149
        %v2182 = vmul.f32 %v1927, %v2150
        %v2183 = vmul.f32 %v1929, %v2150
        %v2184 = vmul.f32 %v1931, %v2151
        %v2185 = vmul.f32 %v1933, %v2151
        %v2186 = vmul.f32 %v1935, %v2152
        %v2187 = vmul.f32 %v1937, %v2152
        %v2188 = vmul.f32 %v1939, %v2153
        %v2189 = vmul.f32 %v1941, %v2153
        %v2190 = vmul.f32 %v1943, %v2154
        %v2191 = vmul.f32 %v1945, %v2154
        %v2192 = vmul.f32 %v1947, %v2155
        %v2193 = vmul.f32 %v1949, %v2155
        %v2194 = vmul.f32 %v1951, %v2156
        %v2195 = vmul.f32 %v1953, %v2156
        %v2196 = vmul.f32 %v1955, %v2157
        %v2197 = vmul.f32 %v1957, %v2157
        %v2198 = vmul.f32 %v1959, %v2158
        %v2199 = vmul.f32 %v1961, %v2158
        %v2200 = vmul.f32 %v1963, %v2159
        %v2201 = vmul.f32 %v1965, %v2159
        %v2202 = vmul.f32 %v1967, %v2160
        %v2203 = vmul.f32 %v1969, %v2160
        %v2204 = vmul.f32 %v1971, %v2161
        %v2205 = vmul.f32 %v1973, %v2161
        %v2206 = vmul.f32 %v1975, %v2162
        %v2207 = vmul.f32 %v1977, %v2162
        %v2208 = vmul.f32 %v1979, %v2163
        %v2209 = vmul.f32 %v1981, %v2163
        %v2210 = vmul.f32 %v1983, %v2164
        %v2211 = vmul.f32 %v1985, %v2164
        %v2212 = vmul.f32 %v1987, %v2165
        %v2213 = vmul.f32 %v1989, %v2165
        %v2214 = vmul.f32 %v1991, %v2166
        %v2215 = vmul.f32 %v1993, %v2166
        %v2216 = vmul.f32 %v1995, %v2167
        %v2217 = vmul.f32 %v1997, %v2167
        %v2218 = vmul.f32 %v1999, %v2168
        %v2219 = vmul.f32 %v2001, %v2168
        %v2220 = vmul.f32 %v2003, %v2169
        %v2221 = vmul.f32 %v2005, %v2169
        %v2222 = vmul.f32 %v2007, %v2170
        %v2223 = vmul.f32 %v2009, %v2170
        %v2224 = vmul.f32 %v2011, %v2171
        %v2225 = vmul.f32 %v2013, %v2171
        %v2226 = vmul.f32 %v2015, %v2172
        %v2227 = vmul.f32 %v2017, %v2172
        %v2228 = vmul.f32 %v2019, %v2173
        %v2229 = vmul.f32 %v2021, %v2173
        %v2230 = vmul.f32 %v2023, %v2174
        %v2231 = vmul.f32 %v2025, %v2174
        %v2232 = vmul.f32 %v2027, %v2175
        %v2233 = vmul.f32 %v2029, %v2175
        %v2234 = vmul.f32 %v2031, %v2176
        %v2235 = vmul.f32 %v2033, %v2176
        %v2236 = vmul.f32 %v2035, %v2177
        %v2237 = vmul.f32 %v2037, %v2177
        %v2238 = vmul.f32 %v2039, %v2178
        %v2239 = vmul.f32 %v2041, %v2178
        %v2240 = vmul.f32 %v2043, %v2179
        %v2241 = vmul.f32 %v2045, %v2179
        %v2242 = vmul.f32 %v2047, %v2180
        %v2243 = vmul.f32 %v2049, %v2180
        %v2244 = vmul.f32 %v2051, %v2181
        %v2245 = vmul.f32 %v2053, %v2181
        %v2246 = vpack.c.bf16 %v1439, %v1435
        %v2247 = vpack.c.bf16 %v1441, %v1437
        %v2248 = vpack.c.bf16 %v1449, %v1445
        %v2249 = vpack.c.bf16 %v1451, %v1447
        %v2250 = vpack.c.bf16 %v1459, %v1455
        %v2251 = vpack.c.bf16 %v1461, %v1457
        %v2252 = vpack.c.bf16 %v1469, %v1465
        %v2253 = vpack.c.bf16 %v1471, %v1467
        %v2254 = vpack.c.bf16 %v2184, %v2182
        %v2255 = vpack.c.bf16 %v2185, %v2183
        %v2256 = vpack.c.bf16 %v2188, %v2186
        %v2257 = vpack.c.bf16 %v2189, %v2187
        %v2258 = vpack.c.bf16 %v2192, %v2190
        %v2259 = vpack.c.bf16 %v2193, %v2191
        %v2260 = vpack.c.bf16 %v2196, %v2194
        %v2261 = vpack.c.bf16 %v2197, %v2195
        %v2262 = vpack.c.bf16 %v2200, %v2198
        %v2263 = vpack.c.bf16 %v2201, %v2199
        %v2264 = vpack.c.bf16 %v2204, %v2202
        %v2265 = vpack.c.bf16 %v2205, %v2203
        %v2266 = vpack.c.bf16 %v2208, %v2206
        %v2267 = vpack.c.bf16 %v2209, %v2207
        %v2268 = vpack.c.bf16 %v2212, %v2210
        %v2269 = vpack.c.bf16 %v2213, %v2211
        %v2270 = vpack.c.bf16 %v2216, %v2214
        %v2271 = vpack.c.bf16 %v2217, %v2215
        %v2272 = vpack.c.bf16 %v2220, %v2218
        %v2273 = vpack.c.bf16 %v2221, %v2219
        %v2274 = vpack.c.bf16 %v2224, %v2222
        %v2275 = vpack.c.bf16 %v2225, %v2223
        %v2276 = vpack.c.bf16 %v2228, %v2226
        %v2277 = vpack.c.bf16 %v2229, %v2227
        %v2278 = vpack.c.bf16 %v2232, %v2230
        %v2279 = vpack.c.bf16 %v2233, %v2231
        %v2280 = vpack.c.bf16 %v2236, %v2234
        %v2281 = vpack.c.bf16 %v2237, %v2235
        %v2282 = vpack.c.bf16 %v2240, %v2238
        %v2283 = vpack.c.bf16 %v2241, %v2239
        %v2284 = vpack.c.bf16 %v2244, %v2242
        %v2285 = vpack.c.bf16 %v2245, %v2243
        %2286 = vmatprep.subr.bf16.mxu0 %v2255
        %2287 = vmatpush1.bf16.xpose.msra.mxu0 %v2254
        %2288 = vmatprep.subr.bf16.mxu0 %v2257
        %2289 = vmatpush1.bf16.xpose.msra.mxu0 %v2256
        %2290 = vmatprep.subr.bf16.mxu0 %v2259
        %2291 = vmatpush1.bf16.xpose.msra.mxu0 %v2258
        %2292 = vmatprep.subr.bf16.mxu0 %v2261
        %2293 = vmatpush1.bf16.xpose.msra.mxu0 %v2260
        %2294 = vmatprep.subr.bf16.mxu0 %v2263
        %2295 = vmatpush1.bf16.xpose.msra.mxu0 %v2262
        %2296 = vmatprep.subr.bf16.mxu0 %v2265
        %2297 = vmatpush1.bf16.xpose.msra.mxu0 %v2264
        %2298 = vmatprep.subr.bf16.mxu0 %v2267
        %2299 = vmatpush1.bf16.xpose.msra.mxu0 %v2266
        %2300 = vmatprep.subr.bf16.mxu0 %v2269
        %2301 = vmatpush1.bf16.xpose.msra.mxu0 %v2268
        %2302 = vmatprep.subr.bf16.mxu0 %v2271
        %2303 = vmatpush1.bf16.xpose.msra.mxu0 %v2270
        %2304 = vmatprep.subr.bf16.mxu0 %v2273
        %2305 = vmatpush1.bf16.xpose.msra.mxu0 %v2272
        %2306 = vmatprep.subr.bf16.mxu0 %v2275
        %2307 = vmatpush1.bf16.xpose.msra.mxu0 %v2274
        %2308 = vmatprep.subr.bf16.mxu0 %v2277
        %2309 = vmatpush1.bf16.xpose.msra.mxu0 %v2276
        %2310 = vmatprep.subr.bf16.mxu0 %v2279
        %2311 = vmatpush1.bf16.xpose.msra.mxu0 %v2278
        %2312 = vmatprep.subr.bf16.mxu0 %v2281
        %2313 = vmatpush1.bf16.xpose.msra.mxu0 %v2280
        %2314 = vmatprep.subr.bf16.mxu0 %v2283
        %2315 = vmatpush1.bf16.xpose.msra.mxu0 %v2282
        %2316 = vmatprep.subr.bf16.mxu0 %v2285
        %2317 = vmatpush1.bf16.xpose.msra.mxu0 %v2284
        %2318 = vmatprep.mubr.bf16.mxu0 %v2247
        %2319 = vmatmul.mubr.bf16.gmra.mrb[0].mxu0 %v2246
        %v2320 = vpop.f32.mrb[0].mxu0
        %v2321 = vadd.f32 0.0, %v2320
        %v2322 = vpop.f32.mrb[0].mxu0
        %v2323 = vadd.f32 0.0, %v2322
        %v2324 = vpop.f32.mrb[0].mxu0
        %v2325 = vadd.f32 0.0, %v2324
        %v2326 = vpop.f32.mrb[0].mxu0
        %v2327 = vadd.f32 0.0, %v2326
        %2328 = vmatprep.mubr.bf16.mxu0 %v2249
        %2329 = vmatmul.mubr.bf16.gmra.mrb[0].mxu0 %v2248
        %v2330 = vpop.f32.mrb[0].mxu0
        %v2331 = vadd.f32 0.0, %v2330
        %v2332 = vpop.f32.mrb[0].mxu0
        %v2333 = vadd.f32 0.0, %v2332
        %v2334 = vpop.f32.mrb[0].mxu0
        %v2335 = vadd.f32 0.0, %v2334
        %v2336 = vpop.f32.mrb[0].mxu0
        %v2337 = vadd.f32 0.0, %v2336
        %2338 = vmatprep.mubr.bf16.mxu0 %v2251
        %2339 = vmatmul.mubr.bf16.gmra.mrb[0].mxu0 %v2250
        %v2340 = vpop.f32.mrb[0].mxu0
        %v2341 = vadd.f32 0.0, %v2340
        %v2342 = vpop.f32.mrb[0].mxu0
        %v2343 = vadd.f32 0.0, %v2342
        %v2344 = vpop.f32.mrb[0].mxu0
        %v2345 = vadd.f32 0.0, %v2344
        %v2346 = vpop.f32.mrb[0].mxu0
        %v2347 = vadd.f32 0.0, %v2346
        %2348 = vmatprep.mubr.bf16.mxu0 %v2253
        %2349 = vmatmul.mubr.bf16.gmra.mrb[0].mxu0 %v2252
        %v2350 = vpop.f32.mrb[0].mxu0
        %v2351 = vadd.f32 0.0, %v2350
        %v2352 = vpop.f32.mrb[0].mxu0
        %v2353 = vadd.f32 0.0, %v2352
        %v2354 = vpop.f32.mrb[0].mxu0
        %v2355 = vadd.f32 0.0, %v2354
        %v2356 = vpop.f32.mrb[0].mxu0
        %v2357 = vadd.f32 0.0, %v2356
        %2358 = vdwg.mxu0
        %s2359 = scalar_lea.vmem %s202, 512 [#allocation2]
        %2360 = vst [vmem:[%s2359] sm:$0xff] %v2182
        %2361 = vst [vmem:[%s2359 + $0x8] sm:$0xff] %v2183
        %2362 = vst [vmem:[%s2359 + $0x10] sm:$0xff] %v2184
        %2363 = vst [vmem:[%s2359 + $0x18] sm:$0xff] %v2185
        %2364 = vst [vmem:[%s2359 + $0x20] sm:$0xff] %v2186
        %2365 = vst [vmem:[%s2359 + $0x28] sm:$0xff] %v2187
        %2366 = vst [vmem:[%s2359 + $0x30] sm:$0xff] %v2188
        %2367 = vst [vmem:[%s2359 + $0x38] sm:$0xff] %v2189
        %2368 = vst [vmem:[%s2359 + $0x40] sm:$0xff] %v2190
        %2369 = vst [vmem:[%s2359 + $0x48] sm:$0xff] %v2191
        %2370 = vst [vmem:[%s2359 + $0x50] sm:$0xff] %v2192
        %2371 = vst [vmem:[%s2359 + $0x58] sm:$0xff] %v2193
        %2372 = vst [vmem:[%s2359 + $0x60] sm:$0xff] %v2194
        %2373 = vst [vmem:[%s2359 + $0x68] sm:$0xff] %v2195
        %2374 = vst [vmem:[%s2359 + $0x70] sm:$0xff] %v2196
        %2375 = vst [vmem:[%s2359 + $0x78] sm:$0xff] %v2197
        %2376 = vst [vmem:[%s2359 + $0x80] sm:$0xff] %v2198
        %2377 = vst [vmem:[%s2359 + $0x88] sm:$0xff] %v2199
        %2378 = vst [vmem:[%s2359 + $0x90] sm:$0xff] %v2200
        %2379 = vst [vmem:[%s2359 + $0x98] sm:$0xff] %v2201
        %2380 = vst [vmem:[%s2359 + $0xa0] sm:$0xff] %v2202
        %2381 = vst [vmem:[%s2359 + $0xa8] sm:$0xff] %v2203
        %2382 = vst [vmem:[%s2359 + $0xb0] sm:$0xff] %v2204
        %2383 = vst [vmem:[%s2359 + $0xb8] sm:$0xff] %v2205
        %2384 = vst [vmem:[%s2359 + $0xc0] sm:$0xff] %v2206
        %2385 = vst [vmem:[%s2359 + $0xc8] sm:$0xff] %v2207
        %2386 = vst [vmem:[%s2359 + $0xd0] sm:$0xff] %v2208
        %2387 = vst [vmem:[%s2359 + $0xd8] sm:$0xff] %v2209
        %2388 = vst [vmem:[%s2359 + $0xe0] sm:$0xff] %v2210
        %2389 = vst [vmem:[%s2359 + $0xe8] sm:$0xff] %v2211
        %2390 = vst [vmem:[%s2359 + $0xf0] sm:$0xff] %v2212
        %2391 = vst [vmem:[%s2359 + $0xf8] sm:$0xff] %v2213
        %2392 = vst [vmem:[%s2359 + $0x100] sm:$0xff] %v2214
        %2393 = vst [vmem:[%s2359 + $0x108] sm:$0xff] %v2215
        %2394 = vst [vmem:[%s2359 + $0x110] sm:$0xff] %v2216
        %2395 = vst [vmem:[%s2359 + $0x118] sm:$0xff] %v2217
        %2396 = vst [vmem:[%s2359 + $0x120] sm:$0xff] %v2218
        %2397 = vst [vmem:[%s2359 + $0x128] sm:$0xff] %v2219
        %2398 = vst [vmem:[%s2359 + $0x130] sm:$0xff] %v2220
        %2399 = vst [vmem:[%s2359 + $0x138] sm:$0xff] %v2221
        %2400 = vst [vmem:[%s2359 + $0x140] sm:$0xff] %v2222
        %2401 = vst [vmem:[%s2359 + $0x148] sm:$0xff] %v2223
        %2402 = vst [vmem:[%s2359 + $0x150] sm:$0xff] %v2224
        %2403 = vst [vmem:[%s2359 + $0x158] sm:$0xff] %v2225
        %2404 = vst [vmem:[%s2359 + $0x160] sm:$0xff] %v2226
        %2405 = vst [vmem:[%s2359 + $0x168] sm:$0xff] %v2227
        %2406 = vst [vmem:[%s2359 + $0x170] sm:$0xff] %v2228
        %2407 = vst [vmem:[%s2359 + $0x178] sm:$0xff] %v2229
        %2408 = vst [vmem:[%s2359 + $0x180] sm:$0xff] %v2230
        %2409 = vst [vmem:[%s2359 + $0x188] sm:$0xff] %v2231
        %2410 = vst [vmem:[%s2359 + $0x190] sm:$0xff] %v2232
        %2411 = vst [vmem:[%s2359 + $0x198] sm:$0xff] %v2233
        %2412 = vst [vmem:[%s2359 + $0x1a0] sm:$0xff] %v2234
        %2413 = vst [vmem:[%s2359 + $0x1a8] sm:$0xff] %v2235
        %2414 = vst [vmem:[%s2359 + $0x1b0] sm:$0xff] %v2236
        %2415 = vst [vmem:[%s2359 + $0x1b8] sm:$0xff] %v2237
        %2416 = vst [vmem:[%s2359 + $0x1c0] sm:$0xff] %v2238
        %2417 = vst [vmem:[%s2359 + $0x1c8] sm:$0xff] %v2239
        %2418 = vst [vmem:[%s2359 + $0x1d0] sm:$0xff] %v2240
        %2419 = vst [vmem:[%s2359 + $0x1d8] sm:$0xff] %v2241
        %2420 = vst [vmem:[%s2359 + $0x1e0] sm:$0xff] %v2242
        %2421 = vst [vmem:[%s2359 + $0x1e8] sm:$0xff] %v2243
        %2422 = vst [vmem:[%s2359 + $0x1f0] sm:$0xff] %v2244
        %2423 = vst [vmem:[%s2359 + $0x1f8] sm:$0xff] %v2245
        %s2424 = scalar_lea.vmem %s215, 128
        %2425 = vst [vmem:[%s2424] sm:$0xff] %v2321
        %2426 = vst [vmem:[%s2424 + $0x8] sm:$0xff] %v2323
        %2427 = vst [vmem:[%s2424 + $0x10] sm:$0xff] %v2325
        %2428 = vst [vmem:[%s2424 + $0x18] sm:$0xff] %v2327
        %2429 = vst [vmem:[%s2424 + $0x20] sm:$0xff] %v2331
        %2430 = vst [vmem:[%s2424 + $0x28] sm:$0xff] %v2333
        %2431 = vst [vmem:[%s2424 + $0x30] sm:$0xff] %v2335
        %2432 = vst [vmem:[%s2424 + $0x38] sm:$0xff] %v2337
        %2433 = vst [vmem:[%s2424 + $0x40] sm:$0xff] %v2341
        %2434 = vst [vmem:[%s2424 + $0x48] sm:$0xff] %v2343
        %2435 = vst [vmem:[%s2424 + $0x50] sm:$0xff] %v2345
        %2436 = vst [vmem:[%s2424 + $0x58] sm:$0xff] %v2347
        %2437 = vst [vmem:[%s2424 + $0x60] sm:$0xff] %v2351
        %2438 = vst [vmem:[%s2424 + $0x68] sm:$0xff] %v2353
        %2439 = vst [vmem:[%s2424 + $0x70] sm:$0xff] %v2355
        %2440 = vst [vmem:[%s2424 + $0x78] sm:$0xff] %v2357
        %s2441 = smul.u32 2, %s19
        %p2442 = scmp.lt.s32.totalorder %s2441, 3
        %s2443 = scalar_select %p2442, %s2441, 3
        %s2444 = smul.addr %s2443, 16
        %s2445 = smul.addr %s2444, 8
        %s2446 = scalar_lea.vmem %s3, %s2445
        %s2447 = sand.u32 %s121, 1
        %s2448 = scalar_lea.sflag [#allocation3], %s2447
        %s2449 = sand.u32 %s121, 1
        %s2450 = smul.addr %s2449, 1024
        %s2451 = scalar_lea.vmem [#allocation2], %s2450
        // Predicated region
        $region33: #{self_attn_forward.1} parent=31 // pred_check
          %p2452 = pneg %p105
        $region34: #{self_attn_forward.1} parent=31 // pred_check_branch
          %2454 = sbr.rel (%p2452) target = $region36
        $region35: #{self_attn_forward.1} parent=31 // pred_region
          %s2455 = smul.u32 2, %s19
        $region36: #{self_attn_forward.1} parent=31 // pred_fallthru
          _
        // Predicated region
        $region37: #{self_attn_forward.1} parent=31 // pred_check
          %p2456 = pneg %p131
        $region38: #{self_attn_forward.1} parent=31 // pred_check_branch
          %2458 = sbr.rel (%p2456) target = $region40
        $region39: #{self_attn_forward.1} parent=31 // pred_region
          %s2459 = smul.u32 2, %s19
          %s2461 = ssub.s32 16384, 16384
          %2462 = vsyncadd %s2448, %s2461
          %s2463 = smul.addr %s2459, 64
          %s2464 = smul.addr %s2463, 128
          %s2465 = scalar_lea.hbm %s4, %s2464
          %s2466 = sshll.u32 %s2451, 4
          %s2467 = int_to_ptr.vmem [resolvable:$true] %s2466
          %2472 = dma.vmem_to_hbm [thread:$0]  %s2467, 16384, %s2465, %s2448, 256, 256, 16
        $region40: #{self_attn_forward.1} parent=31 // pred_fallthru
          _
      $region32: #{self_attn_forward.1} parent=5 // pred_fallthru
        _
      %p2473 = scmp.le.s32.totalorder 2, %s14
      // Predicated region
      $region41: #{self_attn_forward.1} parent=5 // pred_check
        %p2474 = pneg %p2473
      $region42: #{self_attn_forward.1} parent=5 // pred_check_branch
        %2476 = sbr.rel (%p2474) target = $region44
      $region43: #{self_attn_forward.1} parent=5 // pred_region
        %s2477 = ssub.s32 %s14, 2
        // Predicated region
        $region45: #{self_attn_forward.1} parent=43 // pred_check
          %p2478 = pneg %p111
        $region46: #{self_attn_forward.1} parent=43 // pred_check_branch
          %2480 = sbr.rel (%p2478) target = $region48
        $region47: #{self_attn_forward.1} parent=43 // pred_region
          %s2481 = smul.u32 2, %s20
          %p2482 = scmp.lt.s32.totalorder %s2481, 3
          %s2483 = scalar_select %p2482, %s2481, 3
          %s2484 = smul.addr %s2483, 16
          %s2485 = smul.addr %s2484, 8
          %s2486 = scalar_lea.vmem %s3, %s2485
        $region48: #{self_attn_forward.1} parent=43 // pred_fallthru
          _
        // Predicated region
        $region49: #{self_attn_forward.1} parent=43 // pred_check
          %p2487 = pneg %p137
        $region50: #{self_attn_forward.1} parent=43 // pred_check_branch
          %2489 = sbr.rel (%p2487) target = $region52
        $region51: #{self_attn_forward.1} parent=43 // pred_region
          %s2490 = sand.u32 %s122, 1
          %s2491 = scalar_lea.sflag [#allocation3], %s2490
          %s2492 = sand.u32 %s122, 1
          %s2493 = smul.addr %s2492, 1024
          %s2494 = scalar_lea.vmem [#allocation2], %s2493
          %2495 = dma.done %s2491, 16384
        $region52: #{self_attn_forward.1} parent=43 // pred_fallthru
          _
      $region44: #{self_attn_forward.1} parent=5 // pred_fallthru
        _
    $region6: #{self_attn_forward.1} parent=1 // loop_footer
      %s18 = sadd.s32 1, %s14
    $region7: #{self_attn_forward.1} parent=1 // loop_footer_branch
      %13 = sbr.rel target = $region3
    $region8: #{self_attn_forward.1} parent=1 // loop_exit
      _
    %2496 = vsyncpa [#allocation3], 1
    %s2497 = scalar_lea.sflag [#allocation3], 1
    %2498 = vsyncpa %s2497, 1

</llo_original>
